<compile_context>
chip_gen: v5e
topology: v5e:2x2
jax: 0.10.0
libtpu: 0.0.40
codegen_flags: <defaults>
</compile_context>

<pallas_src>
import jax
import jax.numpy as jnp
from jax.experimental import pallas as pl
from jax.experimental.pallas import tpu as pltpu  # noqa: F401  (TPU backend)

K = 4              # Chebyshev order (ChebConv(..., 4))
N_LAYERS = 4       # convs per branch
GN_EPS = 1e-5      # PyG GraphNorm eps
F_SLOT = 32        # lane slot width reserved per branch
N_BRANCH = 3
F_ALL = 128        # 3 * 32 = 96, padded up to a full 128-lane tile
LB_ROW = 4 * N_LAYERS          # row of the linear bias in the packed param array
P_ROWS = ((LB_ROW + 1 + 7) // 8) * 8   # 17 -> 24 (8-sublane aligned)


# ---------------------------------------------------------------------------
# Fused Pallas kernel: the whole module (all 3 branches) in one invocation
# ---------------------------------------------------------------------------
def fused_kernel(t_ref, x_ref, w_ref, pvec_ref, lw_ref, out_ref):
    # t_ref   : [4N, N]   stacked Chebyshev basis [T0; T1; T2; T3] of L_hat
    # x_ref   : [N, F_ALL]            branch-packed node features
    # w_ref   : [N_LAYERS, K, F_ALL, F_ALL]  block-diagonal Cheb weights
    # pvec_ref: [P_ROWS, F_ALL]       packed small params (biases / GN params)
    # lw_ref  : [F_ALL, F_ALL]        block-diagonal linear-head weight
    # out_ref : [8, F_ALL]            one lane-dense output tile
    t_stack = t_ref[...]
    feat0 = x_ref[...]
    pvec = pvec_ref[...]
    n = feat0.shape[0]

    def cheb_layer(x, l):
        # One MXU push computes T_k @ x for all k at once ...
        txs = jnp.dot(t_stack, x, preferred_element_type=jnp.float32)   # [4N, F_ALL]
        # ... then K independent accumulating dots (no concat / relayout).
        acc = jnp.dot(txs[0:n], w_ref[l, 0], preferred_element_type=jnp.float32)
        for k in range(1, K):
            acc = acc + jnp.dot(txs[k * n:(k + 1) * n], w_ref[l, k],
                                preferred_element_type=jnp.float32)
        return acc + pvec[4 * l + 0:4 * l + 1, :]                       # + cheb bias

    def graph_norm(x, l):
        # PyG GraphNorm (single graph): per-channel stats over nodes.
        gw = pvec[4 * l + 1:4 * l + 2, :]
        gb = pvec[4 * l + 2:4 * l + 3, :]
        gms = pvec[4 * l + 3:4 * l + 4, :]
        mean = jnp.mean(x, axis=0, keepdims=True)
        xc = x - mean * gms
        var = jnp.mean(xc * xc, axis=0, keepdims=True)
        return gw * xc * jax.lax.rsqrt(var + GN_EPS) + gb

    x = feat0
    for l in range(N_LAYERS - 1):
        x = cheb_layer(x, l)
        y = graph_norm(x, l)
        x = jnp.where(y >= 0.0, y, 0.1 * y)          # leaky_relu(negative_slope=0.1)

    x = cheb_layer(x, N_LAYERS - 1)
    y = graph_norm(x, N_LAYERS - 1)
    x = jnp.maximum(feat0 + y, 0.0)                  # residual + relu

    # global_mean_pool -> relu -> Linear (block-diag over branches) -> relu
    pooled = jnp.maximum(jnp.mean(x, axis=0, keepdims=True), 0.0)       # [1, F_ALL]
    out = jnp.dot(pooled, lw_ref[...], preferred_element_type=jnp.float32)
    out = jnp.maximum(out + pvec[LB_ROW:LB_ROW + 1, :], 0.0)            # [1, F_ALL]
    # Single lane+sublane-dense unmasked store of the full (8,128) tile.
    out_ref[...] = jnp.broadcast_to(out, out_ref.shape)


# ---------------------------------------------------------------------------
# Plain-JAX glue: scaled Laplacian, Chebyshev basis, parameter packing
# ---------------------------------------------------------------------------
def build_scaled_laplacian(edge_index, num_nodes):
    # L_hat = 2L/lambda_max - I with L = I - D^{-1/2} A D^{-1/2}, lambda_max=2
    #       = -D^{-1/2} A D^{-1/2}        (PyG ChebConv 'sym' semantics)
    src, dst = edge_index[0], edge_index[1]
    a = jnp.zeros((num_nodes, num_nodes), jnp.float32).at[src, dst].add(1.0)
    deg = jnp.sum(a, axis=1)
    dinv = jnp.where(deg > 0.0, 1.0 / jnp.sqrt(jnp.maximum(deg, 1e-12)), 0.0)
    return -(dinv[:, None] * a * dinv[None, :])


def build_cheb_basis(edge_index, num_nodes):
    """Stacked [T0(L_hat); T1; T2; T3] as one [4N, N] matrix."""
    lhat = build_scaled_laplacian(edge_index, num_nodes)
    eye = jnp.eye(num_nodes, dtype=jnp.float32)
    t1 = lhat
    t2 = 2.0 * (lhat @ t1) - eye
    t3 = 2.0 * (lhat @ t2) - t1
    return lhat, jnp.concatenate([eye, t1, t2, t3], axis=0)


def init_cheb(key, fin, fout):
    kw, kb = jax.random.split(key)
    w = 0.1 * jax.random.normal(kw, (K, fin, fout), jnp.float32)
    b = 0.1 * jax.random.normal(kb, (fout,), jnp.float32)
    return w, b


def init_branch_params(key, feats, out_feats):
    # convs: F0->F1, F1->F2, F2->F3, F3->F0  (last conv back to F0 for residual)
    dims = list(zip(feats[:-1], feats[1:])) + [(feats[-1], feats[0])]
    keys = jax.random.split(key, len(dims) + 1)
    cheb, gn = [], []
    for k, (fi, fo) in zip(keys[:-1], dims):
        cheb.append(init_cheb(k, fi, fo))
        # GraphNorm defaults: weight=1, bias=0, mean_scale=1
        gn.append((jnp.ones((fo,), jnp.float32),
                   jnp.zeros((fo,), jnp.float32),
                   jnp.ones((fo,), jnp.float32)))
    klw, klb = jax.random.split(keys[-1])
    lin_w = 0.1 * jax.random.normal(klw, (feats[0], out_feats), jnp.float32)
    lin_b = 0.1 * jax.random.normal(klb, (out_feats,), jnp.float32)
    return cheb, gn, lin_w, lin_b


def pack_all_branches(feat_list, params_list):
    """Pack features & parameters of all branches along the lane axis.

    Branch r occupies lanes [r*F_SLOT, (r+1)*F_SLOT); weights are block-
    diagonal so branches never mix. Padded lanes stay exactly zero through
    the whole pipeline (zero features, zero weights/biases).
    """
    n = feat_list[0].shape[0]
    x_all = jnp.zeros((n, F_ALL), jnp.float32)
    w_all = jnp.zeros((N_LAYERS, K, F_ALL, F_ALL), jnp.float32)
    pvec = jnp.zeros((P_ROWS, F_ALL), jnp.float32)
    lw_all = jnp.zeros((F_ALL, F_ALL), jnp.float32)

    for r, (feat2d, params) in enumerate(zip(feat_list, params_list)):
        cheb, gn, lin_w, lin_b = params
        off = r * F_SLOT
        f0 = feat2d.shape[1]
        assert f0 <= F_SLOT
        x_all = x_all.at[:, off:off + f0].set(feat2d)
        for l, ((w, b), (gw, gb, gms)) in enumerate(zip(cheb, gn)):
            fin, fout = w.shape[1], w.shape[2]
            assert fin <= F_SLOT and fout <= F_SLOT
            w_all = w_all.at[l, :, off:off + fin, off:off + fout].set(w)
            pvec = pvec.at[4 * l + 0, off:off + fout].set(b)
            pvec = pvec.at[4 * l + 1, off:off + fout].set(gw)
            pvec = pvec.at[4 * l + 2, off:off + fout].set(gb)
            pvec = pvec.at[4 * l + 3, off:off + fout].set(gms)
        fin0, of = lin_w.shape
        assert of <= F_SLOT
        lw_all = lw_all.at[off:off + fin0, off:off + of].set(lin_w)
        pvec = pvec.at[LB_ROW, off:off + of].set(lin_b)

    return x_all, w_all, pvec, lw_all


def cheb_gcn3_multi_relu(edge_index, feat, feat_1, feat_2,
                         params1, params2, params3, out_feats):
    # feat / feat_1 / feat_2 come in as [1, N, F]; squeeze the dummy dim.
    n = feat.shape[1]
    _, t_stack = build_cheb_basis(edge_index, n)

    x_all, w_all, pvec, lw_all = pack_all_branches(
        [feat[0], feat_1[0], feat_2[0]], [params1, params2, params3])

    # Single grid-less invocation: whole (tiny) arrays are placed in VMEM,
    # one DMA each, no per-step overhead, no dimension_semantics needed.
    out_tile = pl.pallas_call(
        fused_kernel,
        out_shape=jax.ShapeDtypeStruct((8, F_ALL), jnp.float32),
    )(t_stack, x_all, w_all, pvec, lw_all)

    outs = [out_tile[0, r * F_SLOT: r * F_SLOT + out_feats]
            for r in range(N_BRANCH)]
    return outs[0], outs[1], outs[2]


# ---------------------------------------------------------------------------
# Pure-JAX reference (unpadded, per-branch) for a correctness check
# ---------------------------------------------------------------------------
def reference_branch(lhat, feat, params):
    cheb, gn, lin_w, lin_b = params

    def cheb_conv_ref(x, w, b):
        tx1 = lhat @ x
        tx2 = 2.0 * (lhat @ tx1) - x
        tx3 = 2.0 * (lhat @ tx2) - tx1
        return x @ w[0] + tx1 @ w[1] + tx2 @ w[2] + tx3 @ w[3] + b

    def gn_ref(x, w, b, ms):
        mean = x.mean(0, keepdims=True)
        xc = x - mean * ms
        var = (xc * xc).mean(0, keepdims=True)
        return w * xc * jax.lax.rsqrt(var + GN_EPS) + b

    x = feat
    for i in range(3):
        x = cheb_conv_ref(x, cheb[i][0], cheb[i][1])
        y = gn_ref(x, *gn[i])
        x = jnp.where(y >= 0.0, y, 0.1 * y)
    x = cheb_conv_ref(x, cheb[3][0], cheb[3][1])
    x = jnp.maximum(feat + gn_ref(x, *gn[3]), 0.0)
    pooled = jnp.maximum(x.mean(0), 0.0)
    return jnp.maximum(pooled @ lin_w + lin_b, 0.0)


# ---------------------------------------------------------------------------
if __name__ == "__main__":
    key = jax.random.PRNGKey(0)
    k_e, k_f0, k_f1, k_f2, k_p1, k_p2, k_p3 = jax.random.split(key, 7)

    N = 16
    hidden_feats = [32, 32, 32, 32]
    hidden_feats2 = [16, 16, 16, 16]
    hidden_feats3 = [8, 8, 8, 8]
    out_feats = 8

    # undirected ring + a few random chords
    ring_src = jnp.arange(N, dtype=jnp.int32)
    ring_dst = (ring_src + 1) % N
    extra_src = jax.random.randint(k_e, (8,), 0, N, dtype=jnp.int32)
    extra_dst = (extra_src + 5) % N
    src = jnp.concatenate([ring_src, ring_dst, extra_src, extra_dst])
    dst = jnp.concatenate([ring_dst, ring_src, extra_dst, extra_src])
    edge_index = jnp.stack([src, dst])                       # [2, E]

    feat = jax.random.normal(k_f0, (1, N, hidden_feats[0]), jnp.float32)
    feat_1 = jax.random.normal(k_f1, (1, N, hidden_feats2[0]), jnp.float32)
    feat_2 = jax.random.normal(k_f2, (1, N, hidden_feats3[0]), jnp.float32)

    params1 = init_branch_params(k_p1, hidden_feats, out_feats)
    params2 = init_branch_params(k_p2, hidden_feats2, out_feats)
    params3 = init_branch_params(k_p3, hidden_feats3, out_feats)

    out1, out2, out3 = cheb_gcn3_multi_relu(
        edge_index, feat, feat_1, feat_2, params1, params2, params3, out_feats)
    jax.block_until_ready((out1, out2, out3))

    assert out1.shape == (out_feats,)
    assert out2.shape == (out_feats,)
    assert out3.shape == (out_feats,)

    # correctness check against the unfused pure-JAX reference
    lhat = build_scaled_laplacian(edge_index, N)
    ref1 = reference_branch(lhat, feat[0], params1)
    ref2 = reference_branch(lhat, feat_1[0], params2)
    ref3 = reference_branch(lhat, feat_2[0], params3)
    for got, ref in ((out1, ref1), (out2, ref2), (out3, ref3)):
        assert jnp.allclose(got, ref, rtol=5e-3, atol=5e-3), (got, ref)

    print("KERNEL_OK")
</pallas_src>

<mosaic_0001>
module attributes {stable_mosaic.version = 11 : i64} {
  func.func @fused_kernel(%arg0: memref<64x16xf32, #tpu.memory_space<vmem>>, %arg1: memref<16x128xf32, #tpu.memory_space<vmem>>, %arg2: memref<4x4x128x128xf32, #tpu.memory_space<vmem>>, %arg3: memref<24x128xf32, #tpu.memory_space<vmem>>, %arg4: memref<128x128xf32, #tpu.memory_space<vmem>>, %arg5: memref<8x128xf32, #tpu.memory_space<vmem>>) attributes {dimension_semantics = [], scalar_prefetch = 0 : i64, scratch_operands = 0 : i64, tpu.core_type = #tpu.core_type<tc>} {
    %c0 = arith.constant 0 : index
    %c0_0 = arith.constant 0 : index
    %0 = vector.load %arg0[%c0, %c0_0] : memref<64x16xf32, #tpu.memory_space<vmem>>, vector<64x16xf32>
    %c0_1 = arith.constant 0 : index
    %c0_2 = arith.constant 0 : index
    %1 = vector.load %arg1[%c0_1, %c0_2] : memref<16x128xf32, #tpu.memory_space<vmem>>, vector<16x128xf32>
    %c0_3 = arith.constant 0 : index
    %c0_4 = arith.constant 0 : index
    %2 = vector.load %arg3[%c0_3, %c0_4] : memref<24x128xf32, #tpu.memory_space<vmem>>, vector<24x128xf32>
    %cst = arith.constant dense<0.000000e+00> : vector<64x128xf32>
    %3 = tpu.matmul %0, %1, %cst {dimension_numbers = #tpu.dot_dimension_numbers<[1], [0], [0], [1], [0, 0, 1, 1], [], []>} : vector<64x16xf32>, vector<16x128xf32>, vector<64x128xf32> -> vector<64x128xf32>
    %4 = vector.extract_strided_slice %3 {offsets = [0, 0], sizes = [16, 128], strides = [1, 1]} : vector<64x128xf32> to vector<16x128xf32>
    %c0_5 = arith.constant 0 : index
    %c0_6 = arith.constant 0 : index
    %c0_7 = arith.constant 0 : index
    %c0_8 = arith.constant 0 : index
    %5 = vector.load %arg2[%c0_5, %c0_6, %c0_7, %c0_8] : memref<4x4x128x128xf32, #tpu.memory_space<vmem>>, vector<1x1x128x128xf32>
    %6 = vector.shape_cast %5 : vector<1x1x128x128xf32> to vector<128x128xf32>
    %cst_9 = arith.constant dense<0.000000e+00> : vector<16x128xf32>
    %7 = tpu.matmul %4, %6, %cst_9 {dimension_numbers = #tpu.dot_dimension_numbers<[1], [0], [0], [1], [0, 0, 1, 1], [], []>} : vector<16x128xf32>, vector<128x128xf32>, vector<16x128xf32> -> vector<16x128xf32>
    %8 = vector.extract_strided_slice %3 {offsets = [16, 0], sizes = [16, 128], strides = [1, 1]} : vector<64x128xf32> to vector<16x128xf32>
    %c0_10 = arith.constant 0 : index
    %c1 = arith.constant 1 : index
    %c0_11 = arith.constant 0 : index
    %c0_12 = arith.constant 0 : index
    %9 = vector.load %arg2[%c0_10, %c1, %c0_11, %c0_12] : memref<4x4x128x128xf32, #tpu.memory_space<vmem>>, vector<1x1x128x128xf32>
    %10 = vector.shape_cast %9 : vector<1x1x128x128xf32> to vector<128x128xf32>
    %cst_13 = arith.constant dense<0.000000e+00> : vector<16x128xf32>
    %11 = tpu.matmul %8, %10, %cst_13 {dimension_numbers = #tpu.dot_dimension_numbers<[1], [0], [0], [1], [0, 0, 1, 1], [], []>} : vector<16x128xf32>, vector<128x128xf32>, vector<16x128xf32> -> vector<16x128xf32>
    %12 = arith.addf %7, %11 : vector<16x128xf32>
    %13 = vector.extract_strided_slice %3 {offsets = [32, 0], sizes = [16, 128], strides = [1, 1]} : vector<64x128xf32> to vector<16x128xf32>
    %c0_14 = arith.constant 0 : index
    %c2 = arith.constant 2 : index
    %c0_15 = arith.constant 0 : index
    %c0_16 = arith.constant 0 : index
    %14 = vector.load %arg2[%c0_14, %c2, %c0_15, %c0_16] : memref<4x4x128x128xf32, #tpu.memory_space<vmem>>, vector<1x1x128x128xf32>
    %15 = vector.shape_cast %14 : vector<1x1x128x128xf32> to vector<128x128xf32>
    %cst_17 = arith.constant dense<0.000000e+00> : vector<16x128xf32>
    %16 = tpu.matmul %13, %15, %cst_17 {dimension_numbers = #tpu.dot_dimension_numbers<[1], [0], [0], [1], [0, 0, 1, 1], [], []>} : vector<16x128xf32>, vector<128x128xf32>, vector<16x128xf32> -> vector<16x128xf32>
    %17 = arith.addf %12, %16 : vector<16x128xf32>
    %18 = vector.extract_strided_slice %3 {offsets = [48, 0], sizes = [16, 128], strides = [1, 1]} : vector<64x128xf32> to vector<16x128xf32>
    %c0_18 = arith.constant 0 : index
    %c3 = arith.constant 3 : index
    %c0_19 = arith.constant 0 : index
    %c0_20 = arith.constant 0 : index
    %19 = vector.load %arg2[%c0_18, %c3, %c0_19, %c0_20] : memref<4x4x128x128xf32, #tpu.memory_space<vmem>>, vector<1x1x128x128xf32>
    %20 = vector.shape_cast %19 : vector<1x1x128x128xf32> to vector<128x128xf32>
    %cst_21 = arith.constant dense<0.000000e+00> : vector<16x128xf32>
    %21 = tpu.matmul %18, %20, %cst_21 {dimension_numbers = #tpu.dot_dimension_numbers<[1], [0], [0], [1], [0, 0, 1, 1], [], []>} : vector<16x128xf32>, vector<128x128xf32>, vector<16x128xf32> -> vector<16x128xf32>
    %22 = arith.addf %17, %21 : vector<16x128xf32>
    %23 = vector.extract_strided_slice %2 {offsets = [0, 0], sizes = [1, 128], strides = [1, 1]} : vector<24x128xf32> to vector<1x128xf32>
    %24 = vector.broadcast %23 : vector<1x128xf32> to vector<16x128xf32>
    %25 = arith.addf %22, %24 : vector<16x128xf32>
    %26 = vector.extract_strided_slice %2 {offsets = [1, 0], sizes = [1, 128], strides = [1, 1]} : vector<24x128xf32> to vector<1x128xf32>
    %27 = vector.extract_strided_slice %2 {offsets = [2, 0], sizes = [1, 128], strides = [1, 1]} : vector<24x128xf32> to vector<1x128xf32>
    %28 = vector.extract_strided_slice %2 {offsets = [3, 0], sizes = [1, 128], strides = [1, 1]} : vector<24x128xf32> to vector<1x128xf32>
    %cst_22 = arith.constant dense<0.000000e+00> : vector<128xf32>
    %29 = vector.multi_reduction <add>, %25, %cst_22 [0] : vector<16x128xf32> to vector<128xf32>
    %30 = vector.shape_cast %29 : vector<128xf32> to vector<1x128xf32>
    %cst_23 = arith.constant 1.600000e+01 : f32
    %31 = vector.broadcast %cst_23 : f32 to vector<1x128xf32>
    %32 = arith.divf %30, %31 : vector<1x128xf32>
    %33 = arith.mulf %32, %28 : vector<1x128xf32>
    %34 = vector.broadcast %33 : vector<1x128xf32> to vector<16x128xf32>
    %35 = arith.subf %25, %34 : vector<16x128xf32>
    %36 = arith.mulf %35, %35 : vector<16x128xf32>
    %cst_24 = arith.constant dense<0.000000e+00> : vector<128xf32>
    %37 = vector.multi_reduction <add>, %36, %cst_24 [0] : vector<16x128xf32> to vector<128xf32>
    %38 = vector.shape_cast %37 : vector<128xf32> to vector<1x128xf32>
    %cst_25 = arith.constant 1.600000e+01 : f32
    %39 = vector.broadcast %cst_25 : f32 to vector<1x128xf32>
    %40 = arith.divf %38, %39 : vector<1x128xf32>
    %41 = vector.broadcast %26 : vector<1x128xf32> to vector<16x128xf32>
    %42 = arith.mulf %41, %35 : vector<16x128xf32>
    %cst_26 = arith.constant 9.99999974E-6 : f32
    %43 = vector.broadcast %cst_26 : f32 to vector<1x128xf32>
    %44 = arith.addf %40, %43 : vector<1x128xf32>
    %45 = math.rsqrt %44 : vector<1x128xf32>
    %46 = vector.broadcast %45 : vector<1x128xf32> to vector<16x128xf32>
    %47 = arith.mulf %42, %46 : vector<16x128xf32>
    %48 = vector.broadcast %27 : vector<1x128xf32> to vector<16x128xf32>
    %49 = arith.addf %47, %48 : vector<16x128xf32>
    %cst_27 = arith.constant 0.000000e+00 : f32
    %50 = vector.broadcast %cst_27 : f32 to vector<16x128xf32>
    %51 = arith.cmpf oge, %49, %50 : vector<16x128xf32>
    %cst_28 = arith.constant 1.000000e-01 : f32
    %52 = vector.broadcast %cst_28 : f32 to vector<16x128xf32>
    %53 = arith.mulf %52, %49 : vector<16x128xf32>
    %54 = arith.select %51, %49, %53 : vector<16x128xi1>, vector<16x128xf32>
    %cst_29 = arith.constant dense<0.000000e+00> : vector<64x128xf32>
    %55 = tpu.matmul %0, %54, %cst_29 {dimension_numbers = #tpu.dot_dimension_numbers<[1], [0], [0], [1], [0, 0, 1, 1], [], []>} : vector<64x16xf32>, vector<16x128xf32>, vector<64x128xf32> -> vector<64x128xf32>
    %56 = vector.extract_strided_slice %55 {offsets = [0, 0], sizes = [16, 128], strides = [1, 1]} : vector<64x128xf32> to vector<16x128xf32>
    %c1_30 = arith.constant 1 : index
    %c0_31 = arith.constant 0 : index
    %c0_32 = arith.constant 0 : index
    %c0_33 = arith.constant 0 : index
    %57 = vector.load %arg2[%c1_30, %c0_31, %c0_32, %c0_33] : memref<4x4x128x128xf32, #tpu.memory_space<vmem>>, vector<1x1x128x128xf32>
    %58 = vector.shape_cast %57 : vector<1x1x128x128xf32> to vector<128x128xf32>
    %cst_34 = arith.constant dense<0.000000e+00> : vector<16x128xf32>
    %59 = tpu.matmul %56, %58, %cst_34 {dimension_numbers = #tpu.dot_dimension_numbers<[1], [0], [0], [1], [0, 0, 1, 1], [], []>} : vector<16x128xf32>, vector<128x128xf32>, vector<16x128xf32> -> vector<16x128xf32>
    %60 = vector.extract_strided_slice %55 {offsets = [16, 0], sizes = [16, 128], strides = [1, 1]} : vector<64x128xf32> to vector<16x128xf32>
    %c1_35 = arith.constant 1 : index
    %c1_36 = arith.constant 1 : index
    %c0_37 = arith.constant 0 : index
    %c0_38 = arith.constant 0 : index
    %61 = vector.load %arg2[%c1_35, %c1_36, %c0_37, %c0_38] : memref<4x4x128x128xf32, #tpu.memory_space<vmem>>, vector<1x1x128x128xf32>
    %62 = vector.shape_cast %61 : vector<1x1x128x128xf32> to vector<128x128xf32>
    %cst_39 = arith.constant dense<0.000000e+00> : vector<16x128xf32>
    %63 = tpu.matmul %60, %62, %cst_39 {dimension_numbers = #tpu.dot_dimension_numbers<[1], [0], [0], [1], [0, 0, 1, 1], [], []>} : vector<16x128xf32>, vector<128x128xf32>, vector<16x128xf32> -> vector<16x128xf32>
    %64 = arith.addf %59, %63 : vector<16x128xf32>
    %65 = vector.extract_strided_slice %55 {offsets = [32, 0], sizes = [16, 128], strides = [1, 1]} : vector<64x128xf32> to vector<16x128xf32>
    %c1_40 = arith.constant 1 : index
    %c2_41 = arith.constant 2 : index
    %c0_42 = arith.constant 0 : index
    %c0_43 = arith.constant 0 : index
    %66 = vector.load %arg2[%c1_40, %c2_41, %c0_42, %c0_43] : memref<4x4x128x128xf32, #tpu.memory_space<vmem>>, vector<1x1x128x128xf32>
    %67 = vector.shape_cast %66 : vector<1x1x128x128xf32> to vector<128x128xf32>
    %cst_44 = arith.constant dense<0.000000e+00> : vector<16x128xf32>
    %68 = tpu.matmul %65, %67, %cst_44 {dimension_numbers = #tpu.dot_dimension_numbers<[1], [0], [0], [1], [0, 0, 1, 1], [], []>} : vector<16x128xf32>, vector<128x128xf32>, vector<16x128xf32> -> vector<16x128xf32>
    %69 = arith.addf %64, %68 : vector<16x128xf32>
    %70 = vector.extract_strided_slice %55 {offsets = [48, 0], sizes = [16, 128], strides = [1, 1]} : vector<64x128xf32> to vector<16x128xf32>
    %c1_45 = arith.constant 1 : index
    %c3_46 = arith.constant 3 : index
    %c0_47 = arith.constant 0 : index
    %c0_48 = arith.constant 0 : index
    %71 = vector.load %arg2[%c1_45, %c3_46, %c0_47, %c0_48] : memref<4x4x128x128xf32, #tpu.memory_space<vmem>>, vector<1x1x128x128xf32>
    %72 = vector.shape_cast %71 : vector<1x1x128x128xf32> to vector<128x128xf32>
    %cst_49 = arith.constant dense<0.000000e+00> : vector<16x128xf32>
    %73 = tpu.matmul %70, %72, %cst_49 {dimension_numbers = #tpu.dot_dimension_numbers<[1], [0], [0], [1], [0, 0, 1, 1], [], []>} : vector<16x128xf32>, vector<128x128xf32>, vector<16x128xf32> -> vector<16x128xf32>
    %74 = arith.addf %69, %73 : vector<16x128xf32>
    %75 = vector.extract_strided_slice %2 {offsets = [4, 0], sizes = [1, 128], strides = [1, 1]} : vector<24x128xf32> to vector<1x128xf32>
    %76 = vector.broadcast %75 : vector<1x128xf32> to vector<16x128xf32>
    %77 = arith.addf %74, %76 : vector<16x128xf32>
    %78 = vector.extract_strided_slice %2 {offsets = [5, 0], sizes = [1, 128], strides = [1, 1]} : vector<24x128xf32> to vector<1x128xf32>
    %79 = vector.extract_strided_slice %2 {offsets = [6, 0], sizes = [1, 128], strides = [1, 1]} : vector<24x128xf32> to vector<1x128xf32>
    %80 = vector.extract_strided_slice %2 {offsets = [7, 0], sizes = [1, 128], strides = [1, 1]} : vector<24x128xf32> to vector<1x128xf32>
    %cst_50 = arith.constant dense<0.000000e+00> : vector<128xf32>
    %81 = vector.multi_reduction <add>, %77, %cst_50 [0] : vector<16x128xf32> to vector<128xf32>
    %82 = vector.shape_cast %81 : vector<128xf32> to vector<1x128xf32>
    %cst_51 = arith.constant 1.600000e+01 : f32
    %83 = vector.broadcast %cst_51 : f32 to vector<1x128xf32>
    %84 = arith.divf %82, %83 : vector<1x128xf32>
    %85 = arith.mulf %84, %80 : vector<1x128xf32>
    %86 = vector.broadcast %85 : vector<1x128xf32> to vector<16x128xf32>
    %87 = arith.subf %77, %86 : vector<16x128xf32>
    %88 = arith.mulf %87, %87 : vector<16x128xf32>
    %cst_52 = arith.constant dense<0.000000e+00> : vector<128xf32>
    %89 = vector.multi_reduction <add>, %88, %cst_52 [0] : vector<16x128xf32> to vector<128xf32>
    %90 = vector.shape_cast %89 : vector<128xf32> to vector<1x128xf32>
    %cst_53 = arith.constant 1.600000e+01 : f32
    %91 = vector.broadcast %cst_53 : f32 to vector<1x128xf32>
    %92 = arith.divf %90, %91 : vector<1x128xf32>
    %93 = vector.broadcast %78 : vector<1x128xf32> to vector<16x128xf32>
    %94 = arith.mulf %93, %87 : vector<16x128xf32>
    %cst_54 = arith.constant 9.99999974E-6 : f32
    %95 = vector.broadcast %cst_54 : f32 to vector<1x128xf32>
    %96 = arith.addf %92, %95 : vector<1x128xf32>
    %97 = math.rsqrt %96 : vector<1x128xf32>
    %98 = vector.broadcast %97 : vector<1x128xf32> to vector<16x128xf32>
    %99 = arith.mulf %94, %98 : vector<16x128xf32>
    %100 = vector.broadcast %79 : vector<1x128xf32> to vector<16x128xf32>
    %101 = arith.addf %99, %100 : vector<16x128xf32>
    %cst_55 = arith.constant 0.000000e+00 : f32
    %102 = vector.broadcast %cst_55 : f32 to vector<16x128xf32>
    %103 = arith.cmpf oge, %101, %102 : vector<16x128xf32>
    %cst_56 = arith.constant 1.000000e-01 : f32
    %104 = vector.broadcast %cst_56 : f32 to vector<16x128xf32>
    %105 = arith.mulf %104, %101 : vector<16x128xf32>
    %106 = arith.select %103, %101, %105 : vector<16x128xi1>, vector<16x128xf32>
    %cst_57 = arith.constant dense<0.000000e+00> : vector<64x128xf32>
    %107 = tpu.matmul %0, %106, %cst_57 {dimension_numbers = #tpu.dot_dimension_numbers<[1], [0], [0], [1], [0, 0, 1, 1], [], []>} : vector<64x16xf32>, vector<16x128xf32>, vector<64x128xf32> -> vector<64x128xf32>
    %108 = vector.extract_strided_slice %107 {offsets = [0, 0], sizes = [16, 128], strides = [1, 1]} : vector<64x128xf32> to vector<16x128xf32>
    %c2_58 = arith.constant 2 : index
    %c0_59 = arith.constant 0 : index
    %c0_60 = arith.constant 0 : index
    %c0_61 = arith.constant 0 : index
    %109 = vector.load %arg2[%c2_58, %c0_59, %c0_60, %c0_61] : memref<4x4x128x128xf32, #tpu.memory_space<vmem>>, vector<1x1x128x128xf32>
    %110 = vector.shape_cast %109 : vector<1x1x128x128xf32> to vector<128x128xf32>
    %cst_62 = arith.constant dense<0.000000e+00> : vector<16x128xf32>
    %111 = tpu.matmul %108, %110, %cst_62 {dimension_numbers = #tpu.dot_dimension_numbers<[1], [0], [0], [1], [0, 0, 1, 1], [], []>} : vector<16x128xf32>, vector<128x128xf32>, vector<16x128xf32> -> vector<16x128xf32>
    %112 = vector.extract_strided_slice %107 {offsets = [16, 0], sizes = [16, 128], strides = [1, 1]} : vector<64x128xf32> to vector<16x128xf32>
    %c2_63 = arith.constant 2 : index
    %c1_64 = arith.constant 1 : index
    %c0_65 = arith.constant 0 : index
    %c0_66 = arith.constant 0 : index
    %113 = vector.load %arg2[%c2_63, %c1_64, %c0_65, %c0_66] : memref<4x4x128x128xf32, #tpu.memory_space<vmem>>, vector<1x1x128x128xf32>
    %114 = vector.shape_cast %113 : vector<1x1x128x128xf32> to vector<128x128xf32>
    %cst_67 = arith.constant dense<0.000000e+00> : vector<16x128xf32>
    %115 = tpu.matmul %112, %114, %cst_67 {dimension_numbers = #tpu.dot_dimension_numbers<[1], [0], [0], [1], [0, 0, 1, 1], [], []>} : vector<16x128xf32>, vector<128x128xf32>, vector<16x128xf32> -> vector<16x128xf32>
    %116 = arith.addf %111, %115 : vector<16x128xf32>
    %117 = vector.extract_strided_slice %107 {offsets = [32, 0], sizes = [16, 128], strides = [1, 1]} : vector<64x128xf32> to vector<16x128xf32>
    %c2_68 = arith.constant 2 : index
    %c2_69 = arith.constant 2 : index
    %c0_70 = arith.constant 0 : index
    %c0_71 = arith.constant 0 : index
    %118 = vector.load %arg2[%c2_68, %c2_69, %c0_70, %c0_71] : memref<4x4x128x128xf32, #tpu.memory_space<vmem>>, vector<1x1x128x128xf32>
    %119 = vector.shape_cast %118 : vector<1x1x128x128xf32> to vector<128x128xf32>
    %cst_72 = arith.constant dense<0.000000e+00> : vector<16x128xf32>
    %120 = tpu.matmul %117, %119, %cst_72 {dimension_numbers = #tpu.dot_dimension_numbers<[1], [0], [0], [1], [0, 0, 1, 1], [], []>} : vector<16x128xf32>, vector<128x128xf32>, vector<16x128xf32> -> vector<16x128xf32>
    %121 = arith.addf %116, %120 : vector<16x128xf32>
    %122 = vector.extract_strided_slice %107 {offsets = [48, 0], sizes = [16, 128], strides = [1, 1]} : vector<64x128xf32> to vector<16x128xf32>
    %c2_73 = arith.constant 2 : index
    %c3_74 = arith.constant 3 : index
    %c0_75 = arith.constant 0 : index
    %c0_76 = arith.constant 0 : index
    %123 = vector.load %arg2[%c2_73, %c3_74, %c0_75, %c0_76] : memref<4x4x128x128xf32, #tpu.memory_space<vmem>>, vector<1x1x128x128xf32>
    %124 = vector.shape_cast %123 : vector<1x1x128x128xf32> to vector<128x128xf32>
    %cst_77 = arith.constant dense<0.000000e+00> : vector<16x128xf32>
    %125 = tpu.matmul %122, %124, %cst_77 {dimension_numbers = #tpu.dot_dimension_numbers<[1], [0], [0], [1], [0, 0, 1, 1], [], []>} : vector<16x128xf32>, vector<128x128xf32>, vector<16x128xf32> -> vector<16x128xf32>
    %126 = arith.addf %121, %125 : vector<16x128xf32>
    %127 = vector.extract_strided_slice %2 {offsets = [8, 0], sizes = [1, 128], strides = [1, 1]} : vector<24x128xf32> to vector<1x128xf32>
    %128 = vector.broadcast %127 : vector<1x128xf32> to vector<16x128xf32>
    %129 = arith.addf %126, %128 : vector<16x128xf32>
    %130 = vector.extract_strided_slice %2 {offsets = [9, 0], sizes = [1, 128], strides = [1, 1]} : vector<24x128xf32> to vector<1x128xf32>
    %131 = vector.extract_strided_slice %2 {offsets = [10, 0], sizes = [1, 128], strides = [1, 1]} : vector<24x128xf32> to vector<1x128xf32>
    %132 = vector.extract_strided_slice %2 {offsets = [11, 0], sizes = [1, 128], strides = [1, 1]} : vector<24x128xf32> to vector<1x128xf32>
    %cst_78 = arith.constant dense<0.000000e+00> : vector<128xf32>
    %133 = vector.multi_reduction <add>, %129, %cst_78 [0] : vector<16x128xf32> to vector<128xf32>
    %134 = vector.shape_cast %133 : vector<128xf32> to vector<1x128xf32>
    %cst_79 = arith.constant 1.600000e+01 : f32
    %135 = vector.broadcast %cst_79 : f32 to vector<1x128xf32>
    %136 = arith.divf %134, %135 : vector<1x128xf32>
    %137 = arith.mulf %136, %132 : vector<1x128xf32>
    %138 = vector.broadcast %137 : vector<1x128xf32> to vector<16x128xf32>
    %139 = arith.subf %129, %138 : vector<16x128xf32>
    %140 = arith.mulf %139, %139 : vector<16x128xf32>
    %cst_80 = arith.constant dense<0.000000e+00> : vector<128xf32>
    %141 = vector.multi_reduction <add>, %140, %cst_80 [0] : vector<16x128xf32> to vector<128xf32>
    %142 = vector.shape_cast %141 : vector<128xf32> to vector<1x128xf32>
    %cst_81 = arith.constant 1.600000e+01 : f32
    %143 = vector.broadcast %cst_81 : f32 to vector<1x128xf32>
    %144 = arith.divf %142, %143 : vector<1x128xf32>
    %145 = vector.broadcast %130 : vector<1x128xf32> to vector<16x128xf32>
    %146 = arith.mulf %145, %139 : vector<16x128xf32>
    %cst_82 = arith.constant 9.99999974E-6 : f32
    %147 = vector.broadcast %cst_82 : f32 to vector<1x128xf32>
    %148 = arith.addf %144, %147 : vector<1x128xf32>
    %149 = math.rsqrt %148 : vector<1x128xf32>
    %150 = vector.broadcast %149 : vector<1x128xf32> to vector<16x128xf32>
    %151 = arith.mulf %146, %150 : vector<16x128xf32>
    %152 = vector.broadcast %131 : vector<1x128xf32> to vector<16x128xf32>
    %153 = arith.addf %151, %152 : vector<16x128xf32>
    %cst_83 = arith.constant 0.000000e+00 : f32
    %154 = vector.broadcast %cst_83 : f32 to vector<16x128xf32>
    %155 = arith.cmpf oge, %153, %154 : vector<16x128xf32>
    %cst_84 = arith.constant 1.000000e-01 : f32
    %156 = vector.broadcast %cst_84 : f32 to vector<16x128xf32>
    %157 = arith.mulf %156, %153 : vector<16x128xf32>
    %158 = arith.select %155, %153, %157 : vector<16x128xi1>, vector<16x128xf32>
    %cst_85 = arith.constant dense<0.000000e+00> : vector<64x128xf32>
    %159 = tpu.matmul %0, %158, %cst_85 {dimension_numbers = #tpu.dot_dimension_numbers<[1], [0], [0], [1], [0, 0, 1, 1], [], []>} : vector<64x16xf32>, vector<16x128xf32>, vector<64x128xf32> -> vector<64x128xf32>
    %160 = vector.extract_strided_slice %159 {offsets = [0, 0], sizes = [16, 128], strides = [1, 1]} : vector<64x128xf32> to vector<16x128xf32>
    %c3_86 = arith.constant 3 : index
    %c0_87 = arith.constant 0 : index
    %c0_88 = arith.constant 0 : index
    %c0_89 = arith.constant 0 : index
    %161 = vector.load %arg2[%c3_86, %c0_87, %c0_88, %c0_89] : memref<4x4x128x128xf32, #tpu.memory_space<vmem>>, vector<1x1x128x128xf32>
    %162 = vector.shape_cast %161 : vector<1x1x128x128xf32> to vector<128x128xf32>
    %cst_90 = arith.constant dense<0.000000e+00> : vector<16x128xf32>
    %163 = tpu.matmul %160, %162, %cst_90 {dimension_numbers = #tpu.dot_dimension_numbers<[1], [0], [0], [1], [0, 0, 1, 1], [], []>} : vector<16x128xf32>, vector<128x128xf32>, vector<16x128xf32> -> vector<16x128xf32>
    %164 = vector.extract_strided_slice %159 {offsets = [16, 0], sizes = [16, 128], strides = [1, 1]} : vector<64x128xf32> to vector<16x128xf32>
    %c3_91 = arith.constant 3 : index
    %c1_92 = arith.constant 1 : index
    %c0_93 = arith.constant 0 : index
    %c0_94 = arith.constant 0 : index
    %165 = vector.load %arg2[%c3_91, %c1_92, %c0_93, %c0_94] : memref<4x4x128x128xf32, #tpu.memory_space<vmem>>, vector<1x1x128x128xf32>
    %166 = vector.shape_cast %165 : vector<1x1x128x128xf32> to vector<128x128xf32>
    %cst_95 = arith.constant dense<0.000000e+00> : vector<16x128xf32>
    %167 = tpu.matmul %164, %166, %cst_95 {dimension_numbers = #tpu.dot_dimension_numbers<[1], [0], [0], [1], [0, 0, 1, 1], [], []>} : vector<16x128xf32>, vector<128x128xf32>, vector<16x128xf32> -> vector<16x128xf32>
    %168 = arith.addf %163, %167 : vector<16x128xf32>
    %169 = vector.extract_strided_slice %159 {offsets = [32, 0], sizes = [16, 128], strides = [1, 1]} : vector<64x128xf32> to vector<16x128xf32>
    %c3_96 = arith.constant 3 : index
    %c2_97 = arith.constant 2 : index
    %c0_98 = arith.constant 0 : index
    %c0_99 = arith.constant 0 : index
    %170 = vector.load %arg2[%c3_96, %c2_97, %c0_98, %c0_99] : memref<4x4x128x128xf32, #tpu.memory_space<vmem>>, vector<1x1x128x128xf32>
    %171 = vector.shape_cast %170 : vector<1x1x128x128xf32> to vector<128x128xf32>
    %cst_100 = arith.constant dense<0.000000e+00> : vector<16x128xf32>
    %172 = tpu.matmul %169, %171, %cst_100 {dimension_numbers = #tpu.dot_dimension_numbers<[1], [0], [0], [1], [0, 0, 1, 1], [], []>} : vector<16x128xf32>, vector<128x128xf32>, vector<16x128xf32> -> vector<16x128xf32>
    %173 = arith.addf %168, %172 : vector<16x128xf32>
    %174 = vector.extract_strided_slice %159 {offsets = [48, 0], sizes = [16, 128], strides = [1, 1]} : vector<64x128xf32> to vector<16x128xf32>
    %c3_101 = arith.constant 3 : index
    %c3_102 = arith.constant 3 : index
    %c0_103 = arith.constant 0 : index
    %c0_104 = arith.constant 0 : index
    %175 = vector.load %arg2[%c3_101, %c3_102, %c0_103, %c0_104] : memref<4x4x128x128xf32, #tpu.memory_space<vmem>>, vector<1x1x128x128xf32>
    %176 = vector.shape_cast %175 : vector<1x1x128x128xf32> to vector<128x128xf32>
    %cst_105 = arith.constant dense<0.000000e+00> : vector<16x128xf32>
    %177 = tpu.matmul %174, %176, %cst_105 {dimension_numbers = #tpu.dot_dimension_numbers<[1], [0], [0], [1], [0, 0, 1, 1], [], []>} : vector<16x128xf32>, vector<128x128xf32>, vector<16x128xf32> -> vector<16x128xf32>
    %178 = arith.addf %173, %177 : vector<16x128xf32>
    %179 = vector.extract_strided_slice %2 {offsets = [12, 0], sizes = [1, 128], strides = [1, 1]} : vector<24x128xf32> to vector<1x128xf32>
    %180 = vector.broadcast %179 : vector<1x128xf32> to vector<16x128xf32>
    %181 = arith.addf %178, %180 : vector<16x128xf32>
    %182 = vector.extract_strided_slice %2 {offsets = [13, 0], sizes = [1, 128], strides = [1, 1]} : vector<24x128xf32> to vector<1x128xf32>
    %183 = vector.extract_strided_slice %2 {offsets = [14, 0], sizes = [1, 128], strides = [1, 1]} : vector<24x128xf32> to vector<1x128xf32>
    %184 = vector.extract_strided_slice %2 {offsets = [15, 0], sizes = [1, 128], strides = [1, 1]} : vector<24x128xf32> to vector<1x128xf32>
    %cst_106 = arith.constant dense<0.000000e+00> : vector<128xf32>
    %185 = vector.multi_reduction <add>, %181, %cst_106 [0] : vector<16x128xf32> to vector<128xf32>
    %186 = vector.shape_cast %185 : vector<128xf32> to vector<1x128xf32>
    %cst_107 = arith.constant 1.600000e+01 : f32
    %187 = vector.broadcast %cst_107 : f32 to vector<1x128xf32>
    %188 = arith.divf %186, %187 : vector<1x128xf32>
    %189 = arith.mulf %188, %184 : vector<1x128xf32>
    %190 = vector.broadcast %189 : vector<1x128xf32> to vector<16x128xf32>
    %191 = arith.subf %181, %190 : vector<16x128xf32>
    %192 = arith.mulf %191, %191 : vector<16x128xf32>
    %cst_108 = arith.constant dense<0.000000e+00> : vector<128xf32>
    %193 = vector.multi_reduction <add>, %192, %cst_108 [0] : vector<16x128xf32> to vector<128xf32>
    %194 = vector.shape_cast %193 : vector<128xf32> to vector<1x128xf32>
    %cst_109 = arith.constant 1.600000e+01 : f32
    %195 = vector.broadcast %cst_109 : f32 to vector<1x128xf32>
    %196 = arith.divf %194, %195 : vector<1x128xf32>
    %197 = vector.broadcast %182 : vector<1x128xf32> to vector<16x128xf32>
    %198 = arith.mulf %197, %191 : vector<16x128xf32>
    %cst_110 = arith.constant 9.99999974E-6 : f32
    %199 = vector.broadcast %cst_110 : f32 to vector<1x128xf32>
    %200 = arith.addf %196, %199 : vector<1x128xf32>
    %201 = math.rsqrt %200 : vector<1x128xf32>
    %202 = vector.broadcast %201 : vector<1x128xf32> to vector<16x128xf32>
    %203 = arith.mulf %198, %202 : vector<16x128xf32>
    %204 = vector.broadcast %183 : vector<1x128xf32> to vector<16x128xf32>
    %205 = arith.addf %203, %204 : vector<16x128xf32>
    %206 = arith.addf %1, %205 : vector<16x128xf32>
    %cst_111 = arith.constant 0.000000e+00 : f32
    %207 = vector.broadcast %cst_111 : f32 to vector<16x128xf32>
    %208 = arith.maximumf %206, %207 : vector<16x128xf32>
    %cst_112 = arith.constant dense<0.000000e+00> : vector<128xf32>
    %209 = vector.multi_reduction <add>, %208, %cst_112 [0] : vector<16x128xf32> to vector<128xf32>
    %210 = vector.shape_cast %209 : vector<128xf32> to vector<1x128xf32>
    %cst_113 = arith.constant 1.600000e+01 : f32
    %211 = vector.broadcast %cst_113 : f32 to vector<1x128xf32>
    %212 = arith.divf %210, %211 : vector<1x128xf32>
    %cst_114 = arith.constant 0.000000e+00 : f32
    %213 = vector.broadcast %cst_114 : f32 to vector<1x128xf32>
    %214 = arith.maximumf %212, %213 : vector<1x128xf32>
    %c0_115 = arith.constant 0 : index
    %c0_116 = arith.constant 0 : index
    %215 = vector.load %arg4[%c0_115, %c0_116] : memref<128x128xf32, #tpu.memory_space<vmem>>, vector<128x128xf32>
    %cst_117 = arith.constant dense<0.000000e+00> : vector<1x128xf32>
    %216 = tpu.matmul %214, %215, %cst_117 {dimension_numbers = #tpu.dot_dimension_numbers<[1], [0], [0], [1], [0, 0, 1, 1], [], []>} : vector<1x128xf32>, vector<128x128xf32>, vector<1x128xf32> -> vector<1x128xf32>
    %217 = vector.extract_strided_slice %2 {offsets = [16, 0], sizes = [1, 128], strides = [1, 1]} : vector<24x128xf32> to vector<1x128xf32>
    %218 = arith.addf %216, %217 : vector<1x128xf32>
    %cst_118 = arith.constant 0.000000e+00 : f32
    %219 = vector.broadcast %cst_118 : f32 to vector<1x128xf32>
    %220 = arith.maximumf %218, %219 : vector<1x128xf32>
    %221 = vector.shape_cast %220 : vector<1x128xf32> to vector<1x128xf32>
    %222 = vector.broadcast %221 : vector<1x128xf32> to vector<8x128xf32>
    %c0_119 = arith.constant 0 : index
    %c0_120 = arith.constant 0 : index
    %223 = vector.load %arg5[%c0_119, %c0_120] : memref<8x128xf32, #tpu.memory_space<vmem>>, vector<8x128xf32>
    tpu.vector_store %arg5[%c0_119, %c0_120], %222 {strides = array<i32>} : memref<8x128xf32, #tpu.memory_space<vmem>>, vector<8x128xf32>,
    return
  }
}

</mosaic_0001>

<llo_original>
// kernel: tpu_custom_call.1
$region0: #{tpu_custom_call.1}
  #allocation0 [shape = 'u32[]', space=smem, size = 0x4, offset = 0x4, fixed_abs, tag = 'smem constant byte address 0x4 - core index']
  #allocation1 [shape = 'u32[72,128]{1,0:T(1,128)}', space=vmem, size = 0x9000, scoped, tag = 'internal scratch']
  %s0 = inlined_call_operand.vmem [shape: f32[64,16], index: 0, kind: input, shape index: {}]
  %s1 = inlined_call_operand.vmem [shape: f32[16,128], index: 1, kind: input, shape index: {}]
  %s2 = inlined_call_operand.hbm [shape: f32[4,4,128,128], index: 2, kind: input, shape index: {}]
  %s3 = inlined_call_operand.vmem [shape: f32[24,128], index: 3, kind: input, shape index: {}]
  %s4 = inlined_call_operand.hbm [shape: f32[128,128], index: 4, kind: input, shape index: {}]
  %s5 = inlined_call_operand.hbm [shape: f32[8,128], index: 5, kind: output, shape index: {}]
  %s6 = sld [smem:[#allocation0]]
  $region38: #{tpu_custom_call.1} parent=0
    _
  %s8 = ssub.s32 1, %s6
  %s9 = scalar_select 0, %s8, %s6
  $region1: #{tpu_custom_call.1} parent=0
    #allocation2 [shape = 'u8[1048576]{0}', space=vmem, size = 0x100000, scoped, tag = 'input window, operand 2, single buffered']
    #allocation3 [shape = 's32[1]{0}', space=sflag, size = 0x4, scoped, tag = 'scoped memory for tpu_custom_call.1']
    #allocation4 [shape = 's32[1]{0}', space=sflag, size = 0x4, scoped, tag = 'scoped memory for tpu_custom_call.1']
    #allocation5 [shape = 'u8[65536]{0}', space=vmem, size = 0x10000, scoped, tag = 'input window, operand 4, single buffered']
    #allocation6 [shape = 's32[1]{0}', space=sflag, size = 0x4, scoped, tag = 'scoped memory for tpu_custom_call.1']
    #allocation7 [shape = 'u8[4096]{0}', space=vmem, size = 0x1000, scoped, tag = 'output window, operand 0, single buffered']
    %10 = vsyncpa [#allocation3], 0
    %11 = vsyncpa [#allocation6], 0
    %12 = vsyncpa [#allocation4], 0
    // Predicated region
    $region2: #{tpu_custom_call.1} parent=1 // pred_check
      _
    $region3: #{tpu_custom_call.1} parent=1 // pred_check_branch
      %14 = sbr.rel (0) target = $region5
    $region4: #{tpu_custom_call.1} parent=1 // pred_region
      _
    $region5: #{tpu_custom_call.1} parent=1 // pred_fallthru
      _
    // Predicated region
    $region6: #{tpu_custom_call.1} parent=1 // pred_check
      _
    $region7: #{tpu_custom_call.1} parent=1 // pred_check_branch
      %16 = sbr.rel (0) target = $region9
    $region8: #{tpu_custom_call.1} parent=1 // pred_region
      _
    $region9: #{tpu_custom_call.1} parent=1 // pred_fallthru
      _
    // Predicated region
    $region10: #{tpu_custom_call.1} parent=1 // pred_check
      _
    $region11: #{tpu_custom_call.1} parent=1 // pred_check_branch
      %18 = sbr.rel (0) target = $region13
    $region12: #{tpu_custom_call.1} parent=1 // pred_region
      %20 = vsyncadd [#allocation3], 0
      %s21 = sshll.u32 %s2, 4
      %s22 = int_to_ptr.hbm [resolvable:$true] %s21
      %s23 = sshll.u32 [#allocation2], 4
      %s24 = int_to_ptr.vmem [resolvable:$true] %s23
      %29 = dma.hbm_to_vmem [thread:$0]  %s22, 32768, %s24, [#allocation3], 128, 128, 8
    $region13: #{tpu_custom_call.1} parent=1 // pred_fallthru
      _
    // Predicated region
    $region14: #{tpu_custom_call.1} parent=1 // pred_check
      _
    $region15: #{tpu_custom_call.1} parent=1 // pred_check_branch
      %31 = sbr.rel (0) target = $region17
    $region16: #{tpu_custom_call.1} parent=1 // pred_region
      _
    $region17: #{tpu_custom_call.1} parent=1 // pred_fallthru
      _
    // Predicated region
    $region18: #{tpu_custom_call.1} parent=1 // pred_check
      _
    $region19: #{tpu_custom_call.1} parent=1 // pred_check_branch
      %33 = sbr.rel (0) target = $region21
    $region20: #{tpu_custom_call.1} parent=1 // pred_region
      %35 = vsyncadd [#allocation6], 0
      %s36 = sshll.u32 %s4, 4
      %s37 = int_to_ptr.hbm [resolvable:$true] %s36
      %s38 = sshll.u32 [#allocation5], 4
      %s39 = int_to_ptr.vmem [resolvable:$true] %s38
      %44 = dma.hbm_to_vmem [thread:$0]  %s37, 2048, %s39, [#allocation6], 128, 128, 8
    $region21: #{tpu_custom_call.1} parent=1 // pred_fallthru
      _
    // Predicated region
    $region22: #{tpu_custom_call.1} parent=1 // pred_check
      _
    $region23: #{tpu_custom_call.1} parent=1 // pred_check_branch
      %46 = sbr.rel (0) target = $region25
    $region24: #{tpu_custom_call.1} parent=1 // pred_region
      %48 = dma.done [#allocation3], 32768
    $region25: #{tpu_custom_call.1} parent=1 // pred_fallthru
      _
    // Predicated region
    $region26: #{tpu_custom_call.1} parent=1 // pred_check
      _
    $region27: #{tpu_custom_call.1} parent=1 // pred_check_branch
      %50 = sbr.rel (0) target = $region29
    $region28: #{tpu_custom_call.1} parent=1 // pred_region
      %52 = dma.done [#allocation6], 2048
    $region29: #{tpu_custom_call.1} parent=1 // pred_fallthru
      _
    %v53 = vld [vmem:[%s0] sm:$0xff]
    %v54 = vld [vmem:[%s0 + $0x8] sm:$0xff]
    %v55 = vld [vmem:[%s0 + $0x10] sm:$0xff]
    %v56 = vld [vmem:[%s0 + $0x18] sm:$0xff]
    %v57 = vld [vmem:[%s0 + $0x20] sm:$0xff]
    %v58 = vld [vmem:[%s0 + $0x28] sm:$0xff]
    %v59 = vld [vmem:[%s0 + $0x30] sm:$0xff]
    %v60 = vld [vmem:[%s0 + $0x38] sm:$0xff]
    %v61 = vld [vmem:[%s1] sm:$0xff]
    %v62 = vld [vmem:[%s1 + $0x8] sm:$0xff]
    %v63 = vld [vmem:[%s3] sm:$0xff]
    %v64 = vld [vmem:[%s3 + $0x8] sm:$0xff]
    %v65 = vld [vmem:[%s3 + $0x10] sm:$0xff]
    %vm66 = vcmask 130048
    %v68 = vsel %vm66, %v53, 0
    %v71 = vsel %vm66, %v54, 0
    %v74 = vsel %vm66, %v55, 0
    %v77 = vsel %vm66, %v56, 0
    %v80 = vsel %vm66, %v57, 0
    %v83 = vsel %vm66, %v58, 0
    %v86 = vsel %vm66, %v59, 0
    %v89 = vsel %vm66, %v60, 0
    %91 = vmatpush.msra.mxu0 0.0
    %92 = vmatpush.msra.mxu0 0.0
    %93 = vmatpush.msra.mxu0 0.0
    %94 = vmatpush.msra.mxu0 0.0
    %95 = vmatpush.msra.mxu0 0.0
    %96 = vmatpush.msra.mxu0 0.0
    %97 = vmatpush.msra.mxu0 0.0
    %98 = vmatpush.msra.mxu0 0.0
    %99 = vmatpush.msra.mxu0 0.0
    %100 = vmatpush.msra.mxu0 0.0
    %101 = vmatpush.msra.mxu0 0.0
    %102 = vmatpush.msra.mxu0 0.0
    %103 = vmatpush.msra.mxu0 0.0
    %104 = vmatpush.msra.mxu0 0.0
    %105 = vmatpush.msra.mxu0 %v62
    %106 = vmatpush.msra.mxu0 %v61
    %107 = vmatmul.f32.gmra.mxu0 %v68
    %v108 = vpop.f32.mrf.mxu0
    %v109 = vadd.f32 0.0, %v108
    %110 = vmatmul.f32.gmra.mxu0 %v71
    %v111 = vpop.f32.mrf.mxu0
    %v112 = vadd.f32 0.0, %v111
    %113 = vmatmul.f32.gmra.mxu0 %v74
    %v114 = vpop.f32.mrf.mxu0
    %v115 = vadd.f32 0.0, %v114
    %116 = vmatmul.f32.gmra.mxu0 %v77
    %v117 = vpop.f32.mrf.mxu0
    %v118 = vadd.f32 0.0, %v117
    %119 = vmatmul.f32.gmra.mxu0 %v80
    %v120 = vpop.f32.mrf.mxu0
    %v121 = vadd.f32 0.0, %v120
    %122 = vmatmul.f32.gmra.mxu0 %v83
    %v123 = vpop.f32.mrf.mxu0
    %v124 = vadd.f32 0.0, %v123
    %125 = vmatmul.f32.gmra.mxu0 %v86
    %v126 = vpop.f32.mrf.mxu0
    %v127 = vadd.f32 0.0, %v126
    %128 = vmatmul.f32.gmra.mxu0 %v89
    %v129 = vpop.f32.mrf.mxu0
    %v130 = vadd.f32 0.0, %v129
    %131 = vdwg.mxu0
    %v132 = vld [vmem:[#allocation2] sm:$0xff]
    %v133 = vld [vmem:[#allocation2 + $0x8] sm:$0xff]
    %v134 = vld [vmem:[#allocation2 + $0x10] sm:$0xff]
    %v135 = vld [vmem:[#allocation2 + $0x18] sm:$0xff]
    %v136 = vld [vmem:[#allocation2 + $0x20] sm:$0xff]
    %v137 = vld [vmem:[#allocation2 + $0x28] sm:$0xff]
    %v138 = vld [vmem:[#allocation2 + $0x30] sm:$0xff]
    %v139 = vld [vmem:[#allocation2 + $0x38] sm:$0xff]
    %v140 = vld [vmem:[#allocation2 + $0x40] sm:$0xff]
    %v141 = vld [vmem:[#allocation2 + $0x48] sm:$0xff]
    %v142 = vld [vmem:[#allocation2 + $0x50] sm:$0xff]
    %v143 = vld [vmem:[#allocation2 + $0x58] sm:$0xff]
    %v144 = vld [vmem:[#allocation2 + $0x60] sm:$0xff]
    %v145 = vld [vmem:[#allocation2 + $0x68] sm:$0xff]
    %v146 = vld [vmem:[#allocation2 + $0x70] sm:$0xff]
    %v147 = vld [vmem:[#allocation2 + $0x78] sm:$0xff]
    %s148 = scalar_lea.vmem [#allocation2], 128
    %v149 = vld [vmem:[%s148] sm:$0xff]
    %v150 = vld [vmem:[%s148 + $0x8] sm:$0xff]
    %v151 = vld [vmem:[%s148 + $0x10] sm:$0xff]
    %v152 = vld [vmem:[%s148 + $0x18] sm:$0xff]
    %v153 = vld [vmem:[%s148 + $0x20] sm:$0xff]
    %v154 = vld [vmem:[%s148 + $0x28] sm:$0xff]
    %v155 = vld [vmem:[%s148 + $0x30] sm:$0xff]
    %v156 = vld [vmem:[%s148 + $0x38] sm:$0xff]
    %v157 = vld [vmem:[%s148 + $0x40] sm:$0xff]
    %v158 = vld [vmem:[%s148 + $0x48] sm:$0xff]
    %v159 = vld [vmem:[%s148 + $0x50] sm:$0xff]
    %v160 = vld [vmem:[%s148 + $0x58] sm:$0xff]
    %v161 = vld [vmem:[%s148 + $0x60] sm:$0xff]
    %v162 = vld [vmem:[%s148 + $0x68] sm:$0xff]
    %v163 = vld [vmem:[%s148 + $0x70] sm:$0xff]
    %v164 = vld [vmem:[%s148 + $0x78] sm:$0xff]
    %165 = vmatpush.msra.mxu0 %v164
    %166 = vmatpush.msra.mxu0 %v163
    %167 = vmatpush.msra.mxu0 %v162
    %168 = vmatpush.msra.mxu0 %v161
    %169 = vmatpush.msra.mxu0 %v160
    %170 = vmatpush.msra.mxu0 %v159
    %171 = vmatpush.msra.mxu0 %v158
    %172 = vmatpush.msra.mxu0 %v157
    %173 = vmatpush.msra.mxu0 %v156
    %174 = vmatpush.msra.mxu0 %v155
    %175 = vmatpush.msra.mxu0 %v154
    %176 = vmatpush.msra.mxu0 %v153
    %177 = vmatpush.msra.mxu0 %v152
    %178 = vmatpush.msra.mxu0 %v151
    %179 = vmatpush.msra.mxu0 %v150
    %180 = vmatpush.msra.mxu0 %v149
    %181 = vmatmul.f32.gmra.mxu0 %v115
    %v182 = vpop.f32.mrf.mxu0
    %v183 = vadd.f32 0.0, %v182
    %184 = vmatmul.f32.gmra.mxu0 %v118
    %v185 = vpop.f32.mrf.mxu0
    %v186 = vadd.f32 0.0, %v185
    %187 = vdwg.mxu0
    %188 = vmatpush.msra.mxu0 %v147
    %189 = vmatpush.msra.mxu0 %v146
    %190 = vmatpush.msra.mxu0 %v145
    %191 = vmatpush.msra.mxu0 %v144
    %192 = vmatpush.msra.mxu0 %v143
    %193 = vmatpush.msra.mxu0 %v142
    %194 = vmatpush.msra.mxu0 %v141
    %195 = vmatpush.msra.mxu0 %v140
    %196 = vmatpush.msra.mxu0 %v139
    %197 = vmatpush.msra.mxu0 %v138
    %198 = vmatpush.msra.mxu0 %v137
    %199 = vmatpush.msra.mxu0 %v136
    %200 = vmatpush.msra.mxu0 %v135
    %201 = vmatpush.msra.mxu0 %v134
    %202 = vmatpush.msra.mxu0 %v133
    %203 = vmatpush.msra.mxu0 %v132
    %204 = vmatmul.f32.gmra.mxu0 %v109
    %v205 = vpop.f32.mrf.mxu0
    %v206 = vadd.f32 %v183, %v205
    %207 = vmatmul.f32.gmra.mxu0 %v112
    %v208 = vpop.f32.mrf.mxu0
    %v209 = vadd.f32 %v186, %v208
    %210 = vdwg.mxu0
    %s211 = scalar_lea.vmem [#allocation2], 256
    %v212 = vld [vmem:[%s211] sm:$0xff]
    %v213 = vld [vmem:[%s211 + $0x8] sm:$0xff]
    %v214 = vld [vmem:[%s211 + $0x10] sm:$0xff]
    %v215 = vld [vmem:[%s211 + $0x18] sm:$0xff]
    %v216 = vld [vmem:[%s211 + $0x20] sm:$0xff]
    %v217 = vld [vmem:[%s211 + $0x28] sm:$0xff]
    %v218 = vld [vmem:[%s211 + $0x30] sm:$0xff]
    %v219 = vld [vmem:[%s211 + $0x38] sm:$0xff]
    %v220 = vld [vmem:[%s211 + $0x40] sm:$0xff]
    %v221 = vld [vmem:[%s211 + $0x48] sm:$0xff]
    %v222 = vld [vmem:[%s211 + $0x50] sm:$0xff]
    %v223 = vld [vmem:[%s211 + $0x58] sm:$0xff]
    %v224 = vld [vmem:[%s211 + $0x60] sm:$0xff]
    %v225 = vld [vmem:[%s211 + $0x68] sm:$0xff]
    %v226 = vld [vmem:[%s211 + $0x70] sm:$0xff]
    %v227 = vld [vmem:[%s211 + $0x78] sm:$0xff]
    %228 = vmatpush.msra.mxu0 %v227
    %229 = vmatpush.msra.mxu0 %v226
    %230 = vmatpush.msra.mxu0 %v225
    %231 = vmatpush.msra.mxu0 %v224
    %232 = vmatpush.msra.mxu0 %v223
    %233 = vmatpush.msra.mxu0 %v222
    %234 = vmatpush.msra.mxu0 %v221
    %235 = vmatpush.msra.mxu0 %v220
    %236 = vmatpush.msra.mxu0 %v219
    %237 = vmatpush.msra.mxu0 %v218
    %238 = vmatpush.msra.mxu0 %v217
    %239 = vmatpush.msra.mxu0 %v216
    %240 = vmatpush.msra.mxu0 %v215
    %241 = vmatpush.msra.mxu0 %v214
    %242 = vmatpush.msra.mxu0 %v213
    %243 = vmatpush.msra.mxu0 %v212
    %244 = vmatmul.f32.gmra.mxu0 %v121
    %v245 = vpop.f32.mrf.mxu0
    %v246 = vadd.f32 0.0, %v245
    %247 = vmatmul.f32.gmra.mxu0 %v124
    %v248 = vpop.f32.mrf.mxu0
    %v249 = vadd.f32 0.0, %v248
    %250 = vdwg.mxu0
    %v251 = vadd.f32 %v206, %v246
    %v252 = vadd.f32 %v209, %v249
    %s253 = scalar_lea.vmem [#allocation2], 384
    %v254 = vld [vmem:[%s253] sm:$0xff]
    %v255 = vld [vmem:[%s253 + $0x8] sm:$0xff]
    %v256 = vld [vmem:[%s253 + $0x10] sm:$0xff]
    %v257 = vld [vmem:[%s253 + $0x18] sm:$0xff]
    %v258 = vld [vmem:[%s253 + $0x20] sm:$0xff]
    %v259 = vld [vmem:[%s253 + $0x28] sm:$0xff]
    %v260 = vld [vmem:[%s253 + $0x30] sm:$0xff]
    %v261 = vld [vmem:[%s253 + $0x38] sm:$0xff]
    %v262 = vld [vmem:[%s253 + $0x40] sm:$0xff]
    %v263 = vld [vmem:[%s253 + $0x48] sm:$0xff]
    %v264 = vld [vmem:[%s253 + $0x50] sm:$0xff]
    %v265 = vld [vmem:[%s253 + $0x58] sm:$0xff]
    %v266 = vld [vmem:[%s253 + $0x60] sm:$0xff]
    %v267 = vld [vmem:[%s253 + $0x68] sm:$0xff]
    %v268 = vld [vmem:[%s253 + $0x70] sm:$0xff]
    %v269 = vld [vmem:[%s253 + $0x78] sm:$0xff]
    %270 = vmatpush.msra.mxu0 %v269
    %271 = vmatpush.msra.mxu0 %v268
    %272 = vmatpush.msra.mxu0 %v267
    %273 = vmatpush.msra.mxu0 %v266
    %274 = vmatpush.msra.mxu0 %v265
    %275 = vmatpush.msra.mxu0 %v264
    %276 = vmatpush.msra.mxu0 %v263
    %277 = vmatpush.msra.mxu0 %v262
    %278 = vmatpush.msra.mxu0 %v261
    %279 = vmatpush.msra.mxu0 %v260
    %280 = vmatpush.msra.mxu0 %v259
    %281 = vmatpush.msra.mxu0 %v258
    %282 = vmatpush.msra.mxu0 %v257
    %283 = vmatpush.msra.mxu0 %v256
    %284 = vmatpush.msra.mxu0 %v255
    %285 = vmatpush.msra.mxu0 %v254
    %286 = vmatmul.f32.gmra.mxu0 %v127
    %v287 = vpop.f32.mrf.mxu0
    %v288 = vadd.f32 0.0, %v287
    %289 = vmatmul.f32.gmra.mxu0 %v130
    %v290 = vpop.f32.mrf.mxu0
    %v291 = vadd.f32 0.0, %v290
    %292 = vdwg.mxu0
    %v293 = vadd.f32 %v251, %v288
    %v294 = vadd.f32 %v252, %v291
    %v295 = vperm.slane %v63, 0
    %v296 = vadd.f32 %v293, %v295
    %v297 = vadd.f32 %v294, %v295
    %v298 = vadd.f32 %v296, %v297
    %v299 = vrot.slane %v298, 4
    %v300 = vadd.f32 %v298, %v299
    %v301 = vrot.slane %v300, 2
    %v302 = vadd.f32 %v300, %v301
    %v303 = vrot.slane %v302, 1
    %v304 = vadd.f32 %v302, %v303
    %v305 = vrcp.pop 16.0
    %v306 = vmul.f32 16.0, %v305
    %v307 = vsub.f32 1.0, %v306
    %v308 = vmul.f32 %v305, %v307
    %v309 = vadd.f32 %v305, %v308
    %vm310 = vweird.f32 %v305
    %v311 = vsel %vm310, %v305, %v309
    %v312 = vmul.f32 %v304, %v311
    %v313 = vmul.f32 %v312, %v63
    %v314 = vperm.slane %v313, 3
    %v315 = vsub.f32 %v296, %v314
    %v316 = vsub.f32 %v297, %v314
    %v317 = vmul.f32 %v315, %v315
    %v318 = vmul.f32 %v316, %v316
    %v319 = vadd.f32 %v317, %v318
    %v320 = vrot.slane %v319, 4
    %v321 = vadd.f32 %v319, %v320
    %v322 = vrot.slane %v321, 2
    %v323 = vadd.f32 %v321, %v322
    %v324 = vrot.slane %v323, 1
    %v325 = vadd.f32 %v323, %v324
    %v326 = vmul.f32 %v325, %v311
    %v327 = vperm.slane %v63, 1
    %v328 = vmul.f32 %v327, %v315
    %v329 = vmul.f32 %v327, %v316
    %v330 = vadd.f32 %v326, 1e-05
    %v331 = vrsqrt.pop %v330
    %v332 = vmul.f32 %v331, %v330
    %v333 = vmul.f32 %v332, %v331
    %v334 = vmul.f32 0.5, %v333
    %v335 = vsub.f32 1.5, %v334
    %v336 = vmul.f32 %v331, %v335
    %vm337 = vweird.f32 %v330
    %vm338 = vweird.f32 %v331
    %vm339 = vmor %vm337, %vm338
    %v340 = vsel %vm339, %v331, %v336
    %v341 = vmul.f32 %v328, %v340
    %v342 = vmul.f32 %v329, %v340
    %v343 = vperm.slane %v63, 2
    %v344 = vadd.f32 %v341, %v343
    %v345 = vadd.f32 %v342, %v343
    %vm346 = vcmp.ge.f32.partialorder %v344, 0.0
    %vm347 = vcmp.ge.f32.partialorder %v345, 0.0
    %v348 = vmul.f32 %v344, 0.1
    %v349 = vmul.f32 %v345, 0.1
    %v350 = vsel %vm346, %v344, %v348
    %v351 = vsel %vm347, %v345, %v349
    %352 = vmatpush.msra.mxu0 0.0
    %353 = vmatpush.msra.mxu0 0.0
    %354 = vmatpush.msra.mxu0 0.0
    %355 = vmatpush.msra.mxu0 0.0
    %356 = vmatpush.msra.mxu0 0.0
    %357 = vmatpush.msra.mxu0 0.0
    %358 = vmatpush.msra.mxu0 0.0
    %359 = vmatpush.msra.mxu0 0.0
    %360 = vmatpush.msra.mxu0 0.0
    %361 = vmatpush.msra.mxu0 0.0
    %362 = vmatpush.msra.mxu0 0.0
    %363 = vmatpush.msra.mxu0 0.0
    %364 = vmatpush.msra.mxu0 0.0
    %365 = vmatpush.msra.mxu0 0.0
    %366 = vmatpush.msra.mxu0 %v351
    %367 = vmatpush.msra.mxu0 %v350
    %368 = vmatmul.f32.gmra.mxu0 %v68
    %v369 = vpop.f32.mrf.mxu0
    %v370 = vadd.f32 0.0, %v369
    %371 = vmatmul.f32.gmra.mxu0 %v71
    %v372 = vpop.f32.mrf.mxu0
    %v373 = vadd.f32 0.0, %v372
    %374 = vmatmul.f32.gmra.mxu0 %v74
    %v375 = vpop.f32.mrf.mxu0
    %v376 = vadd.f32 0.0, %v375
    %377 = vmatmul.f32.gmra.mxu0 %v77
    %v378 = vpop.f32.mrf.mxu0
    %v379 = vadd.f32 0.0, %v378
    %380 = vmatmul.f32.gmra.mxu0 %v80
    %v381 = vpop.f32.mrf.mxu0
    %v382 = vadd.f32 0.0, %v381
    %383 = vmatmul.f32.gmra.mxu0 %v83
    %v384 = vpop.f32.mrf.mxu0
    %v385 = vadd.f32 0.0, %v384
    %386 = vmatmul.f32.gmra.mxu0 %v86
    %v387 = vpop.f32.mrf.mxu0
    %v388 = vadd.f32 0.0, %v387
    %389 = vmatmul.f32.gmra.mxu0 %v89
    %v390 = vpop.f32.mrf.mxu0
    %v391 = vadd.f32 0.0, %v390
    %392 = vdwg.mxu0
    %s393 = scalar_lea.vmem [#allocation2], 512
    %v394 = vld [vmem:[%s393] sm:$0xff]
    %v395 = vld [vmem:[%s393 + $0x8] sm:$0xff]
    %v396 = vld [vmem:[%s393 + $0x10] sm:$0xff]
    %v397 = vld [vmem:[%s393 + $0x18] sm:$0xff]
    %v398 = vld [vmem:[%s393 + $0x20] sm:$0xff]
    %v399 = vld [vmem:[%s393 + $0x28] sm:$0xff]
    %v400 = vld [vmem:[%s393 + $0x30] sm:$0xff]
    %v401 = vld [vmem:[%s393 + $0x38] sm:$0xff]
    %v402 = vld [vmem:[%s393 + $0x40] sm:$0xff]
    %v403 = vld [vmem:[%s393 + $0x48] sm:$0xff]
    %v404 = vld [vmem:[%s393 + $0x50] sm:$0xff]
    %v405 = vld [vmem:[%s393 + $0x58] sm:$0xff]
    %v406 = vld [vmem:[%s393 + $0x60] sm:$0xff]
    %v407 = vld [vmem:[%s393 + $0x68] sm:$0xff]
    %v408 = vld [vmem:[%s393 + $0x70] sm:$0xff]
    %v409 = vld [vmem:[%s393 + $0x78] sm:$0xff]
    %s410 = scalar_lea.vmem [#allocation2], 640
    %v411 = vld [vmem:[%s410] sm:$0xff]
    %v412 = vld [vmem:[%s410 + $0x8] sm:$0xff]
    %v413 = vld [vmem:[%s410 + $0x10] sm:$0xff]
    %v414 = vld [vmem:[%s410 + $0x18] sm:$0xff]
    %v415 = vld [vmem:[%s410 + $0x20] sm:$0xff]
    %v416 = vld [vmem:[%s410 + $0x28] sm:$0xff]
    %v417 = vld [vmem:[%s410 + $0x30] sm:$0xff]
    %v418 = vld [vmem:[%s410 + $0x38] sm:$0xff]
    %v419 = vld [vmem:[%s410 + $0x40] sm:$0xff]
    %v420 = vld [vmem:[%s410 + $0x48] sm:$0xff]
    %v421 = vld [vmem:[%s410 + $0x50] sm:$0xff]
    %v422 = vld [vmem:[%s410 + $0x58] sm:$0xff]
    %v423 = vld [vmem:[%s410 + $0x60] sm:$0xff]
    %v424 = vld [vmem:[%s410 + $0x68] sm:$0xff]
    %v425 = vld [vmem:[%s410 + $0x70] sm:$0xff]
    %v426 = vld [vmem:[%s410 + $0x78] sm:$0xff]
    %427 = vmatpush.msra.mxu0 %v426
    %428 = vmatpush.msra.mxu0 %v425
    %429 = vmatpush.msra.mxu0 %v424
    %430 = vmatpush.msra.mxu0 %v423
    %431 = vmatpush.msra.mxu0 %v422
    %432 = vmatpush.msra.mxu0 %v421
    %433 = vmatpush.msra.mxu0 %v420
    %434 = vmatpush.msra.mxu0 %v419
    %435 = vmatpush.msra.mxu0 %v418
    %436 = vmatpush.msra.mxu0 %v417
    %437 = vmatpush.msra.mxu0 %v416
    %438 = vmatpush.msra.mxu0 %v415
    %439 = vmatpush.msra.mxu0 %v414
    %440 = vmatpush.msra.mxu0 %v413
    %441 = vmatpush.msra.mxu0 %v412
    %442 = vmatpush.msra.mxu0 %v411
    %443 = vmatmul.f32.gmra.mxu0 %v376
    %v444 = vpop.f32.mrf.mxu0
    %v445 = vadd.f32 0.0, %v444
    %446 = vmatmul.f32.gmra.mxu0 %v379
    %v447 = vpop.f32.mrf.mxu0
    %v448 = vadd.f32 0.0, %v447
    %449 = vdwg.mxu0
    %450 = vmatpush.msra.mxu0 %v409
    %451 = vmatpush.msra.mxu0 %v408
    %452 = vmatpush.msra.mxu0 %v407
    %453 = vmatpush.msra.mxu0 %v406
    %454 = vmatpush.msra.mxu0 %v405
    %455 = vmatpush.msra.mxu0 %v404
    %456 = vmatpush.msra.mxu0 %v403
    %457 = vmatpush.msra.mxu0 %v402
    %458 = vmatpush.msra.mxu0 %v401
    %459 = vmatpush.msra.mxu0 %v400
    %460 = vmatpush.msra.mxu0 %v399
    %461 = vmatpush.msra.mxu0 %v398
    %462 = vmatpush.msra.mxu0 %v397
    %463 = vmatpush.msra.mxu0 %v396
    %464 = vmatpush.msra.mxu0 %v395
    %465 = vmatpush.msra.mxu0 %v394
    %466 = vmatmul.f32.gmra.mxu0 %v370
    %v467 = vpop.f32.mrf.mxu0
    %v468 = vadd.f32 %v445, %v467
    %469 = vmatmul.f32.gmra.mxu0 %v373
    %v470 = vpop.f32.mrf.mxu0
    %v471 = vadd.f32 %v448, %v470
    %472 = vdwg.mxu0
    %s473 = scalar_lea.vmem [#allocation2], 768
    %v474 = vld [vmem:[%s473] sm:$0xff]
    %v475 = vld [vmem:[%s473 + $0x8] sm:$0xff]
    %v476 = vld [vmem:[%s473 + $0x10] sm:$0xff]
    %v477 = vld [vmem:[%s473 + $0x18] sm:$0xff]
    %v478 = vld [vmem:[%s473 + $0x20] sm:$0xff]
    %v479 = vld [vmem:[%s473 + $0x28] sm:$0xff]
    %v480 = vld [vmem:[%s473 + $0x30] sm:$0xff]
    %v481 = vld [vmem:[%s473 + $0x38] sm:$0xff]
    %v482 = vld [vmem:[%s473 + $0x40] sm:$0xff]
    %v483 = vld [vmem:[%s473 + $0x48] sm:$0xff]
    %v484 = vld [vmem:[%s473 + $0x50] sm:$0xff]
    %v485 = vld [vmem:[%s473 + $0x58] sm:$0xff]
    %v486 = vld [vmem:[%s473 + $0x60] sm:$0xff]
    %v487 = vld [vmem:[%s473 + $0x68] sm:$0xff]
    %v488 = vld [vmem:[%s473 + $0x70] sm:$0xff]
    %v489 = vld [vmem:[%s473 + $0x78] sm:$0xff]
    %490 = vmatpush.msra.mxu0 %v489
    %491 = vmatpush.msra.mxu0 %v488
    %492 = vmatpush.msra.mxu0 %v487
    %493 = vmatpush.msra.mxu0 %v486
    %494 = vmatpush.msra.mxu0 %v485
    %495 = vmatpush.msra.mxu0 %v484
    %496 = vmatpush.msra.mxu0 %v483
    %497 = vmatpush.msra.mxu0 %v482
    %498 = vmatpush.msra.mxu0 %v481
    %499 = vmatpush.msra.mxu0 %v480
    %500 = vmatpush.msra.mxu0 %v479
    %501 = vmatpush.msra.mxu0 %v478
    %502 = vmatpush.msra.mxu0 %v477
    %503 = vmatpush.msra.mxu0 %v476
    %504 = vmatpush.msra.mxu0 %v475
    %505 = vmatpush.msra.mxu0 %v474
    %506 = vmatmul.f32.gmra.mxu0 %v382
    %v507 = vpop.f32.mrf.mxu0
    %v508 = vadd.f32 0.0, %v507
    %509 = vmatmul.f32.gmra.mxu0 %v385
    %v510 = vpop.f32.mrf.mxu0
    %v511 = vadd.f32 0.0, %v510
    %512 = vdwg.mxu0
    %v513 = vadd.f32 %v468, %v508
    %v514 = vadd.f32 %v471, %v511
    %s515 = scalar_lea.vmem [#allocation2], 896
    %v516 = vld [vmem:[%s515] sm:$0xff]
    %v517 = vld [vmem:[%s515 + $0x8] sm:$0xff]
    %v518 = vld [vmem:[%s515 + $0x10] sm:$0xff]
    %v519 = vld [vmem:[%s515 + $0x18] sm:$0xff]
    %v520 = vld [vmem:[%s515 + $0x20] sm:$0xff]
    %v521 = vld [vmem:[%s515 + $0x28] sm:$0xff]
    %v522 = vld [vmem:[%s515 + $0x30] sm:$0xff]
    %v523 = vld [vmem:[%s515 + $0x38] sm:$0xff]
    %v524 = vld [vmem:[%s515 + $0x40] sm:$0xff]
    %v525 = vld [vmem:[%s515 + $0x48] sm:$0xff]
    %v526 = vld [vmem:[%s515 + $0x50] sm:$0xff]
    %v527 = vld [vmem:[%s515 + $0x58] sm:$0xff]
    %v528 = vld [vmem:[%s515 + $0x60] sm:$0xff]
    %v529 = vld [vmem:[%s515 + $0x68] sm:$0xff]
    %v530 = vld [vmem:[%s515 + $0x70] sm:$0xff]
    %v531 = vld [vmem:[%s515 + $0x78] sm:$0xff]
    %532 = vmatpush.msra.mxu0 %v531
    %533 = vmatpush.msra.mxu0 %v530
    %534 = vmatpush.msra.mxu0 %v529
    %535 = vmatpush.msra.mxu0 %v528
    %536 = vmatpush.msra.mxu0 %v527
    %537 = vmatpush.msra.mxu0 %v526
    %538 = vmatpush.msra.mxu0 %v525
    %539 = vmatpush.msra.mxu0 %v524
    %540 = vmatpush.msra.mxu0 %v523
    %541 = vmatpush.msra.mxu0 %v522
    %542 = vmatpush.msra.mxu0 %v521
    %543 = vmatpush.msra.mxu0 %v520
    %544 = vmatpush.msra.mxu0 %v519
    %545 = vmatpush.msra.mxu0 %v518
    %546 = vmatpush.msra.mxu0 %v517
    %547 = vmatpush.msra.mxu0 %v516
    %548 = vmatmul.f32.gmra.mxu0 %v388
    %v549 = vpop.f32.mrf.mxu0
    %v550 = vadd.f32 0.0, %v549
    %551 = vmatmul.f32.gmra.mxu0 %v391
    %v552 = vpop.f32.mrf.mxu0
    %v553 = vadd.f32 0.0, %v552
    %554 = vdwg.mxu0
    %v555 = vadd.f32 %v513, %v550
    %v556 = vadd.f32 %v514, %v553
    %v557 = vperm.slane %v63, 4
    %v558 = vadd.f32 %v555, %v557
    %v559 = vadd.f32 %v556, %v557
    %v560 = vadd.f32 %v558, %v559
    %v561 = vrot.slane %v560, 4
    %v562 = vadd.f32 %v560, %v561
    %v563 = vrot.slane %v562, 2
    %v564 = vadd.f32 %v562, %v563
    %v565 = vrot.slane %v564, 1
    %v566 = vadd.f32 %v564, %v565
    %v567 = vmul.f32 %v566, %v311
    %v568 = vmul.f32 %v567, %v63
    %v569 = vperm.slane %v568, 7
    %v570 = vsub.f32 %v558, %v569
    %v571 = vsub.f32 %v559, %v569
    %v572 = vmul.f32 %v570, %v570
    %v573 = vmul.f32 %v571, %v571
    %v574 = vadd.f32 %v572, %v573
    %v575 = vrot.slane %v574, 4
    %v576 = vadd.f32 %v574, %v575
    %v577 = vrot.slane %v576, 2
    %v578 = vadd.f32 %v576, %v577
    %v579 = vrot.slane %v578, 1
    %v580 = vadd.f32 %v578, %v579
    %v581 = vmul.f32 %v580, %v311
    %v582 = vperm.slane %v63, 5
    %v583 = vmul.f32 %v582, %v570
    %v584 = vmul.f32 %v582, %v571
    %v585 = vadd.f32 %v581, 1e-05
    %v586 = vrsqrt.pop %v585
    %v587 = vmul.f32 %v586, %v585
    %v588 = vmul.f32 %v587, %v586
    %v589 = vmul.f32 0.5, %v588
    %v590 = vsub.f32 1.5, %v589
    %v591 = vmul.f32 %v586, %v590
    %vm592 = vweird.f32 %v585
    %vm593 = vweird.f32 %v586
    %vm594 = vmor %vm592, %vm593
    %v595 = vsel %vm594, %v586, %v591
    %v596 = vmul.f32 %v583, %v595
    %v597 = vmul.f32 %v584, %v595
    %v598 = vperm.slane %v63, 6
    %v599 = vadd.f32 %v596, %v598
    %v600 = vadd.f32 %v597, %v598
    %vm601 = vcmp.ge.f32.partialorder %v599, 0.0
    %vm602 = vcmp.ge.f32.partialorder %v600, 0.0
    %v603 = vmul.f32 %v599, 0.1
    %v604 = vmul.f32 %v600, 0.1
    %v605 = vsel %vm601, %v599, %v603
    %v606 = vsel %vm602, %v600, %v604
    %607 = vmatpush.msra.mxu0 0.0
    %608 = vmatpush.msra.mxu0 0.0
    %609 = vmatpush.msra.mxu0 0.0
    %610 = vmatpush.msra.mxu0 0.0
    %611 = vmatpush.msra.mxu0 0.0
    %612 = vmatpush.msra.mxu0 0.0
    %613 = vmatpush.msra.mxu0 0.0
    %614 = vmatpush.msra.mxu0 0.0
    %615 = vmatpush.msra.mxu0 0.0
    %616 = vmatpush.msra.mxu0 0.0
    %617 = vmatpush.msra.mxu0 0.0
    %618 = vmatpush.msra.mxu0 0.0
    %619 = vmatpush.msra.mxu0 0.0
    %620 = vmatpush.msra.mxu0 0.0
    %621 = vmatpush.msra.mxu0 %v606
    %622 = vmatpush.msra.mxu0 %v605
    %623 = vmatmul.f32.gmra.mxu0 %v68
    %v624 = vpop.f32.mrf.mxu0
    %v625 = vadd.f32 0.0, %v624
    %626 = vmatmul.f32.gmra.mxu0 %v71
    %v627 = vpop.f32.mrf.mxu0
    %v628 = vadd.f32 0.0, %v627
    %629 = vmatmul.f32.gmra.mxu0 %v74
    %v630 = vpop.f32.mrf.mxu0
    %v631 = vadd.f32 0.0, %v630
    %632 = vmatmul.f32.gmra.mxu0 %v77
    %v633 = vpop.f32.mrf.mxu0
    %v634 = vadd.f32 0.0, %v633
    %635 = vmatmul.f32.gmra.mxu0 %v80
    %v636 = vpop.f32.mrf.mxu0
    %v637 = vadd.f32 0.0, %v636
    %638 = vmatmul.f32.gmra.mxu0 %v83
    %v639 = vpop.f32.mrf.mxu0
    %v640 = vadd.f32 0.0, %v639
    %641 = vmatmul.f32.gmra.mxu0 %v86
    %v642 = vpop.f32.mrf.mxu0
    %v643 = vadd.f32 0.0, %v642
    %644 = vmatmul.f32.gmra.mxu0 %v89
    %v645 = vpop.f32.mrf.mxu0
    %v646 = vadd.f32 0.0, %v645
    %647 = vdwg.mxu0
    %s648 = scalar_lea.vmem [#allocation2], 1024
    %v649 = vld [vmem:[%s648] sm:$0xff]
    %v650 = vld [vmem:[%s648 + $0x8] sm:$0xff]
    %v651 = vld [vmem:[%s648 + $0x10] sm:$0xff]
    %v652 = vld [vmem:[%s648 + $0x18] sm:$0xff]
    %v653 = vld [vmem:[%s648 + $0x20] sm:$0xff]
    %v654 = vld [vmem:[%s648 + $0x28] sm:$0xff]
    %v655 = vld [vmem:[%s648 + $0x30] sm:$0xff]
    %v656 = vld [vmem:[%s648 + $0x38] sm:$0xff]
    %v657 = vld [vmem:[%s648 + $0x40] sm:$0xff]
    %v658 = vld [vmem:[%s648 + $0x48] sm:$0xff]
    %v659 = vld [vmem:[%s648 + $0x50] sm:$0xff]
    %v660 = vld [vmem:[%s648 + $0x58] sm:$0xff]
    %v661 = vld [vmem:[%s648 + $0x60] sm:$0xff]
    %v662 = vld [vmem:[%s648 + $0x68] sm:$0xff]
    %v663 = vld [vmem:[%s648 + $0x70] sm:$0xff]
    %v664 = vld [vmem:[%s648 + $0x78] sm:$0xff]
    %s665 = scalar_lea.vmem [#allocation2], 1152
    %v666 = vld [vmem:[%s665] sm:$0xff]
    %v667 = vld [vmem:[%s665 + $0x8] sm:$0xff]
    %v668 = vld [vmem:[%s665 + $0x10] sm:$0xff]
    %v669 = vld [vmem:[%s665 + $0x18] sm:$0xff]
    %v670 = vld [vmem:[%s665 + $0x20] sm:$0xff]
    %v671 = vld [vmem:[%s665 + $0x28] sm:$0xff]
    %v672 = vld [vmem:[%s665 + $0x30] sm:$0xff]
    %v673 = vld [vmem:[%s665 + $0x38] sm:$0xff]
    %v674 = vld [vmem:[%s665 + $0x40] sm:$0xff]
    %v675 = vld [vmem:[%s665 + $0x48] sm:$0xff]
    %v676 = vld [vmem:[%s665 + $0x50] sm:$0xff]
    %v677 = vld [vmem:[%s665 + $0x58] sm:$0xff]
    %v678 = vld [vmem:[%s665 + $0x60] sm:$0xff]
    %v679 = vld [vmem:[%s665 + $0x68] sm:$0xff]
    %v680 = vld [vmem:[%s665 + $0x70] sm:$0xff]
    %v681 = vld [vmem:[%s665 + $0x78] sm:$0xff]
    %682 = vmatpush.msra.mxu0 %v681
    %683 = vmatpush.msra.mxu0 %v680
    %684 = vmatpush.msra.mxu0 %v679
    %685 = vmatpush.msra.mxu0 %v678
    %686 = vmatpush.msra.mxu0 %v677
    %687 = vmatpush.msra.mxu0 %v676
    %688 = vmatpush.msra.mxu0 %v675
    %689 = vmatpush.msra.mxu0 %v674
    %690 = vmatpush.msra.mxu0 %v673
    %691 = vmatpush.msra.mxu0 %v672
    %692 = vmatpush.msra.mxu0 %v671
    %693 = vmatpush.msra.mxu0 %v670
    %694 = vmatpush.msra.mxu0 %v669
    %695 = vmatpush.msra.mxu0 %v668
    %696 = vmatpush.msra.mxu0 %v667
    %697 = vmatpush.msra.mxu0 %v666
    %698 = vmatmul.f32.gmra.mxu0 %v631
    %v699 = vpop.f32.mrf.mxu0
    %v700 = vadd.f32 0.0, %v699
    %701 = vmatmul.f32.gmra.mxu0 %v634
    %v702 = vpop.f32.mrf.mxu0
    %v703 = vadd.f32 0.0, %v702
    %704 = vdwg.mxu0
    %705 = vmatpush.msra.mxu0 %v664
    %706 = vmatpush.msra.mxu0 %v663
    %707 = vmatpush.msra.mxu0 %v662
    %708 = vmatpush.msra.mxu0 %v661
    %709 = vmatpush.msra.mxu0 %v660
    %710 = vmatpush.msra.mxu0 %v659
    %711 = vmatpush.msra.mxu0 %v658
    %712 = vmatpush.msra.mxu0 %v657
    %713 = vmatpush.msra.mxu0 %v656
    %714 = vmatpush.msra.mxu0 %v655
    %715 = vmatpush.msra.mxu0 %v654
    %716 = vmatpush.msra.mxu0 %v653
    %717 = vmatpush.msra.mxu0 %v652
    %718 = vmatpush.msra.mxu0 %v651
    %719 = vmatpush.msra.mxu0 %v650
    %720 = vmatpush.msra.mxu0 %v649
    %721 = vmatmul.f32.gmra.mxu0 %v625
    %v722 = vpop.f32.mrf.mxu0
    %v723 = vadd.f32 %v700, %v722
    %724 = vmatmul.f32.gmra.mxu0 %v628
    %v725 = vpop.f32.mrf.mxu0
    %v726 = vadd.f32 %v703, %v725
    %727 = vdwg.mxu0
    %s728 = scalar_lea.vmem [#allocation2], 1280
    %v729 = vld [vmem:[%s728] sm:$0xff]
    %v730 = vld [vmem:[%s728 + $0x8] sm:$0xff]
    %v731 = vld [vmem:[%s728 + $0x10] sm:$0xff]
    %v732 = vld [vmem:[%s728 + $0x18] sm:$0xff]
    %v733 = vld [vmem:[%s728 + $0x20] sm:$0xff]
    %v734 = vld [vmem:[%s728 + $0x28] sm:$0xff]
    %v735 = vld [vmem:[%s728 + $0x30] sm:$0xff]
    %v736 = vld [vmem:[%s728 + $0x38] sm:$0xff]
    %v737 = vld [vmem:[%s728 + $0x40] sm:$0xff]
    %v738 = vld [vmem:[%s728 + $0x48] sm:$0xff]
    %v739 = vld [vmem:[%s728 + $0x50] sm:$0xff]
    %v740 = vld [vmem:[%s728 + $0x58] sm:$0xff]
    %v741 = vld [vmem:[%s728 + $0x60] sm:$0xff]
    %v742 = vld [vmem:[%s728 + $0x68] sm:$0xff]
    %v743 = vld [vmem:[%s728 + $0x70] sm:$0xff]
    %v744 = vld [vmem:[%s728 + $0x78] sm:$0xff]
    %745 = vmatpush.msra.mxu0 %v744
    %746 = vmatpush.msra.mxu0 %v743
    %747 = vmatpush.msra.mxu0 %v742
    %748 = vmatpush.msra.mxu0 %v741
    %749 = vmatpush.msra.mxu0 %v740
    %750 = vmatpush.msra.mxu0 %v739
    %751 = vmatpush.msra.mxu0 %v738
    %752 = vmatpush.msra.mxu0 %v737
    %753 = vmatpush.msra.mxu0 %v736
    %754 = vmatpush.msra.mxu0 %v735
    %755 = vmatpush.msra.mxu0 %v734
    %756 = vmatpush.msra.mxu0 %v733
    %757 = vmatpush.msra.mxu0 %v732
    %758 = vmatpush.msra.mxu0 %v731
    %759 = vmatpush.msra.mxu0 %v730
    %760 = vmatpush.msra.mxu0 %v729
    %761 = vmatmul.f32.gmra.mxu0 %v637
    %v762 = vpop.f32.mrf.mxu0
    %v763 = vadd.f32 0.0, %v762
    %764 = vmatmul.f32.gmra.mxu0 %v640
    %v765 = vpop.f32.mrf.mxu0
    %v766 = vadd.f32 0.0, %v765
    %767 = vdwg.mxu0
    %v768 = vadd.f32 %v723, %v763
    %v769 = vadd.f32 %v726, %v766
    %s770 = scalar_lea.vmem [#allocation2], 1408
    %v771 = vld [vmem:[%s770] sm:$0xff]
    %v772 = vld [vmem:[%s770 + $0x8] sm:$0xff]
    %v773 = vld [vmem:[%s770 + $0x10] sm:$0xff]
    %v774 = vld [vmem:[%s770 + $0x18] sm:$0xff]
    %v775 = vld [vmem:[%s770 + $0x20] sm:$0xff]
    %v776 = vld [vmem:[%s770 + $0x28] sm:$0xff]
    %v777 = vld [vmem:[%s770 + $0x30] sm:$0xff]
    %v778 = vld [vmem:[%s770 + $0x38] sm:$0xff]
    %v779 = vld [vmem:[%s770 + $0x40] sm:$0xff]
    %v780 = vld [vmem:[%s770 + $0x48] sm:$0xff]
    %v781 = vld [vmem:[%s770 + $0x50] sm:$0xff]
    %v782 = vld [vmem:[%s770 + $0x58] sm:$0xff]
    %v783 = vld [vmem:[%s770 + $0x60] sm:$0xff]
    %v784 = vld [vmem:[%s770 + $0x68] sm:$0xff]
    %v785 = vld [vmem:[%s770 + $0x70] sm:$0xff]
    %v786 = vld [vmem:[%s770 + $0x78] sm:$0xff]
    %787 = vmatpush.msra.mxu0 %v786
    %788 = vmatpush.msra.mxu0 %v785
    %789 = vmatpush.msra.mxu0 %v784
    %790 = vmatpush.msra.mxu0 %v783
    %791 = vmatpush.msra.mxu0 %v782
    %792 = vmatpush.msra.mxu0 %v781
    %793 = vmatpush.msra.mxu0 %v780
    %794 = vmatpush.msra.mxu0 %v779
    %795 = vmatpush.msra.mxu0 %v778
    %796 = vmatpush.msra.mxu0 %v777
    %797 = vmatpush.msra.mxu0 %v776
    %798 = vmatpush.msra.mxu0 %v775
    %799 = vmatpush.msra.mxu0 %v774
    %800 = vmatpush.msra.mxu0 %v773
    %801 = vmatpush.msra.mxu0 %v772
    %802 = vmatpush.msra.mxu0 %v771
    %803 = vmatmul.f32.gmra.mxu0 %v643
    %v804 = vpop.f32.mrf.mxu0
    %v805 = vadd.f32 0.0, %v804
    %806 = vmatmul.f32.gmra.mxu0 %v646
    %v807 = vpop.f32.mrf.mxu0
    %v808 = vadd.f32 0.0, %v807
    %809 = vdwg.mxu0
    %v810 = vadd.f32 %v768, %v805
    %v811 = vadd.f32 %v769, %v808
    %v812 = vperm.slane %v64, 0
    %v813 = vadd.f32 %v810, %v812
    %v814 = vadd.f32 %v811, %v812
    %v815 = vadd.f32 %v813, %v814
    %v816 = vrot.slane %v815, 4
    %v817 = vadd.f32 %v815, %v816
    %v818 = vrot.slane %v817, 2
    %v819 = vadd.f32 %v817, %v818
    %v820 = vrot.slane %v819, 1
    %v821 = vadd.f32 %v819, %v820
    %v822 = vmul.f32 %v821, %v311
    %v823 = vmul.f32 %v822, %v64
    %v824 = vperm.slane %v823, 3
    %v825 = vsub.f32 %v813, %v824
    %v826 = vsub.f32 %v814, %v824
    %v827 = vmul.f32 %v825, %v825
    %v828 = vmul.f32 %v826, %v826
    %v829 = vadd.f32 %v827, %v828
    %v830 = vrot.slane %v829, 4
    %v831 = vadd.f32 %v829, %v830
    %v832 = vrot.slane %v831, 2
    %v833 = vadd.f32 %v831, %v832
    %v834 = vrot.slane %v833, 1
    %v835 = vadd.f32 %v833, %v834
    %v836 = vmul.f32 %v835, %v311
    %v837 = vperm.slane %v64, 1
    %v838 = vmul.f32 %v837, %v825
    %v839 = vmul.f32 %v837, %v826
    %v840 = vadd.f32 %v836, 1e-05
    %v841 = vrsqrt.pop %v840
    %v842 = vmul.f32 %v841, %v840
    %v843 = vmul.f32 %v842, %v841
    %v844 = vmul.f32 0.5, %v843
    %v845 = vsub.f32 1.5, %v844
    %v846 = vmul.f32 %v841, %v845
    %vm847 = vweird.f32 %v840
    %vm848 = vweird.f32 %v841
    %vm849 = vmor %vm847, %vm848
    %v850 = vsel %vm849, %v841, %v846
    %v851 = vmul.f32 %v838, %v850
    %v852 = vmul.f32 %v839, %v850
    %v853 = vperm.slane %v64, 2
    %v854 = vadd.f32 %v851, %v853
    %v855 = vadd.f32 %v852, %v853
    %vm856 = vcmp.ge.f32.partialorder %v854, 0.0
    %vm857 = vcmp.ge.f32.partialorder %v855, 0.0
    %v858 = vmul.f32 %v854, 0.1
    %v859 = vmul.f32 %v855, 0.1
    %v860 = vsel %vm856, %v854, %v858
    %v861 = vsel %vm857, %v855, %v859
    %862 = vmatpush.msra.mxu0 0.0
    %863 = vmatpush.msra.mxu0 0.0
    %864 = vmatpush.msra.mxu0 0.0
    %865 = vmatpush.msra.mxu0 0.0
    %866 = vmatpush.msra.mxu0 0.0
    %867 = vmatpush.msra.mxu0 0.0
    %868 = vmatpush.msra.mxu0 0.0
    %869 = vmatpush.msra.mxu0 0.0
    %870 = vmatpush.msra.mxu0 0.0
    %871 = vmatpush.msra.mxu0 0.0
    %872 = vmatpush.msra.mxu0 0.0
    %873 = vmatpush.msra.mxu0 0.0
    %874 = vmatpush.msra.mxu0 0.0
    %875 = vmatpush.msra.mxu0 0.0
    %876 = vmatpush.msra.mxu0 %v861
    %877 = vmatpush.msra.mxu0 %v860
    %878 = vmatmul.f32.gmra.mxu0 %v68
    %v879 = vpop.f32.mrf.mxu0
    %v880 = vadd.f32 0.0, %v879
    %881 = vmatmul.f32.gmra.mxu0 %v71
    %v882 = vpop.f32.mrf.mxu0
    %v883 = vadd.f32 0.0, %v882
    %884 = vmatmul.f32.gmra.mxu0 %v74
    %v885 = vpop.f32.mrf.mxu0
    %v886 = vadd.f32 0.0, %v885
    %887 = vmatmul.f32.gmra.mxu0 %v77
    %v888 = vpop.f32.mrf.mxu0
    %v889 = vadd.f32 0.0, %v888
    %890 = vmatmul.f32.gmra.mxu0 %v80
    %v891 = vpop.f32.mrf.mxu0
    %v892 = vadd.f32 0.0, %v891
    %893 = vmatmul.f32.gmra.mxu0 %v83
    %v894 = vpop.f32.mrf.mxu0
    %v895 = vadd.f32 0.0, %v894
    %896 = vmatmul.f32.gmra.mxu0 %v86
    %v897 = vpop.f32.mrf.mxu0
    %v898 = vadd.f32 0.0, %v897
    %899 = vmatmul.f32.gmra.mxu0 %v89
    %v900 = vpop.f32.mrf.mxu0
    %v901 = vadd.f32 0.0, %v900
    %902 = vdwg.mxu0
    %s903 = scalar_lea.vmem [#allocation2], 1536
    %v904 = vld [vmem:[%s903] sm:$0xff]
    %v905 = vld [vmem:[%s903 + $0x8] sm:$0xff]
    %v906 = vld [vmem:[%s903 + $0x10] sm:$0xff]
    %v907 = vld [vmem:[%s903 + $0x18] sm:$0xff]
    %v908 = vld [vmem:[%s903 + $0x20] sm:$0xff]
    %v909 = vld [vmem:[%s903 + $0x28] sm:$0xff]
    %v910 = vld [vmem:[%s903 + $0x30] sm:$0xff]
    %v911 = vld [vmem:[%s903 + $0x38] sm:$0xff]
    %v912 = vld [vmem:[%s903 + $0x40] sm:$0xff]
    %v913 = vld [vmem:[%s903 + $0x48] sm:$0xff]
    %v914 = vld [vmem:[%s903 + $0x50] sm:$0xff]
    %v915 = vld [vmem:[%s903 + $0x58] sm:$0xff]
    %v916 = vld [vmem:[%s903 + $0x60] sm:$0xff]
    %v917 = vld [vmem:[%s903 + $0x68] sm:$0xff]
    %v918 = vld [vmem:[%s903 + $0x70] sm:$0xff]
    %v919 = vld [vmem:[%s903 + $0x78] sm:$0xff]
    %s920 = scalar_lea.vmem [#allocation2], 1664
    %v921 = vld [vmem:[%s920] sm:$0xff]
    %v922 = vld [vmem:[%s920 + $0x8] sm:$0xff]
    %v923 = vld [vmem:[%s920 + $0x10] sm:$0xff]
    %v924 = vld [vmem:[%s920 + $0x18] sm:$0xff]
    %v925 = vld [vmem:[%s920 + $0x20] sm:$0xff]
    %v926 = vld [vmem:[%s920 + $0x28] sm:$0xff]
    %v927 = vld [vmem:[%s920 + $0x30] sm:$0xff]
    %v928 = vld [vmem:[%s920 + $0x38] sm:$0xff]
    %v929 = vld [vmem:[%s920 + $0x40] sm:$0xff]
    %v930 = vld [vmem:[%s920 + $0x48] sm:$0xff]
    %v931 = vld [vmem:[%s920 + $0x50] sm:$0xff]
    %v932 = vld [vmem:[%s920 + $0x58] sm:$0xff]
    %v933 = vld [vmem:[%s920 + $0x60] sm:$0xff]
    %v934 = vld [vmem:[%s920 + $0x68] sm:$0xff]
    %v935 = vld [vmem:[%s920 + $0x70] sm:$0xff]
    %v936 = vld [vmem:[%s920 + $0x78] sm:$0xff]
    %937 = vmatpush.msra.mxu0 %v936
    %938 = vmatpush.msra.mxu0 %v935
    %939 = vmatpush.msra.mxu0 %v934
    %940 = vmatpush.msra.mxu0 %v933
    %941 = vmatpush.msra.mxu0 %v932
    %942 = vmatpush.msra.mxu0 %v931
    %943 = vmatpush.msra.mxu0 %v930
    %944 = vmatpush.msra.mxu0 %v929
    %945 = vmatpush.msra.mxu0 %v928
    %946 = vmatpush.msra.mxu0 %v927
    %947 = vmatpush.msra.mxu0 %v926
    %948 = vmatpush.msra.mxu0 %v925
    %949 = vmatpush.msra.mxu0 %v924
    %950 = vmatpush.msra.mxu0 %v923
    %951 = vmatpush.msra.mxu0 %v922
    %952 = vmatpush.msra.mxu0 %v921
    %953 = vmatmul.f32.gmra.mxu0 %v886
    %v954 = vpop.f32.mrf.mxu0
    %v955 = vadd.f32 0.0, %v954
    %956 = vmatmul.f32.gmra.mxu0 %v889
    %v957 = vpop.f32.mrf.mxu0
    %v958 = vadd.f32 0.0, %v957
    %959 = vdwg.mxu0
    %960 = vmatpush.msra.mxu0 %v919
    %961 = vmatpush.msra.mxu0 %v918
    %962 = vmatpush.msra.mxu0 %v917
    %963 = vmatpush.msra.mxu0 %v916
    %964 = vmatpush.msra.mxu0 %v915
    %965 = vmatpush.msra.mxu0 %v914
    %966 = vmatpush.msra.mxu0 %v913
    %967 = vmatpush.msra.mxu0 %v912
    %968 = vmatpush.msra.mxu0 %v911
    %969 = vmatpush.msra.mxu0 %v910
    %970 = vmatpush.msra.mxu0 %v909
    %971 = vmatpush.msra.mxu0 %v908
    %972 = vmatpush.msra.mxu0 %v907
    %973 = vmatpush.msra.mxu0 %v906
    %974 = vmatpush.msra.mxu0 %v905
    %975 = vmatpush.msra.mxu0 %v904
    %976 = vmatmul.f32.gmra.mxu0 %v880
    %v977 = vpop.f32.mrf.mxu0
    %v978 = vadd.f32 %v955, %v977
    %979 = vmatmul.f32.gmra.mxu0 %v883
    %v980 = vpop.f32.mrf.mxu0
    %v981 = vadd.f32 %v958, %v980
    %982 = vdwg.mxu0
    %s983 = scalar_lea.vmem [#allocation2], 1792
    %v984 = vld [vmem:[%s983] sm:$0xff]
    %v985 = vld [vmem:[%s983 + $0x8] sm:$0xff]
    %v986 = vld [vmem:[%s983 + $0x10] sm:$0xff]
    %v987 = vld [vmem:[%s983 + $0x18] sm:$0xff]
    %v988 = vld [vmem:[%s983 + $0x20] sm:$0xff]
    %v989 = vld [vmem:[%s983 + $0x28] sm:$0xff]
    %v990 = vld [vmem:[%s983 + $0x30] sm:$0xff]
    %v991 = vld [vmem:[%s983 + $0x38] sm:$0xff]
    %v992 = vld [vmem:[%s983 + $0x40] sm:$0xff]
    %v993 = vld [vmem:[%s983 + $0x48] sm:$0xff]
    %v994 = vld [vmem:[%s983 + $0x50] sm:$0xff]
    %v995 = vld [vmem:[%s983 + $0x58] sm:$0xff]
    %v996 = vld [vmem:[%s983 + $0x60] sm:$0xff]
    %v997 = vld [vmem:[%s983 + $0x68] sm:$0xff]
    %v998 = vld [vmem:[%s983 + $0x70] sm:$0xff]
    %v999 = vld [vmem:[%s983 + $0x78] sm:$0xff]
    %1000 = vmatpush.msra.mxu0 %v999
    %1001 = vmatpush.msra.mxu0 %v998
    %1002 = vmatpush.msra.mxu0 %v997
    %1003 = vmatpush.msra.mxu0 %v996
    %1004 = vmatpush.msra.mxu0 %v995
    %1005 = vmatpush.msra.mxu0 %v994
    %1006 = vmatpush.msra.mxu0 %v993
    %1007 = vmatpush.msra.mxu0 %v992
    %1008 = vmatpush.msra.mxu0 %v991
    %1009 = vmatpush.msra.mxu0 %v990
    %1010 = vmatpush.msra.mxu0 %v989
    %1011 = vmatpush.msra.mxu0 %v988
    %1012 = vmatpush.msra.mxu0 %v987
    %1013 = vmatpush.msra.mxu0 %v986
    %1014 = vmatpush.msra.mxu0 %v985
    %1015 = vmatpush.msra.mxu0 %v984
    %1016 = vmatmul.f32.gmra.mxu0 %v892
    %v1017 = vpop.f32.mrf.mxu0
    %v1018 = vadd.f32 0.0, %v1017
    %1019 = vmatmul.f32.gmra.mxu0 %v895
    %v1020 = vpop.f32.mrf.mxu0
    %v1021 = vadd.f32 0.0, %v1020
    %1022 = vdwg.mxu0
    %v1023 = vadd.f32 %v978, %v1018
    %v1024 = vadd.f32 %v981, %v1021
    %s1025 = scalar_lea.vmem [#allocation2], 1920
    %v1026 = vld [vmem:[%s1025] sm:$0xff]
    %v1027 = vld [vmem:[%s1025 + $0x8] sm:$0xff]
    %v1028 = vld [vmem:[%s1025 + $0x10] sm:$0xff]
    %v1029 = vld [vmem:[%s1025 + $0x18] sm:$0xff]
    %v1030 = vld [vmem:[%s1025 + $0x20] sm:$0xff]
    %v1031 = vld [vmem:[%s1025 + $0x28] sm:$0xff]
    %v1032 = vld [vmem:[%s1025 + $0x30] sm:$0xff]
    %v1033 = vld [vmem:[%s1025 + $0x38] sm:$0xff]
    %v1034 = vld [vmem:[%s1025 + $0x40] sm:$0xff]
    %v1035 = vld [vmem:[%s1025 + $0x48] sm:$0xff]
    %v1036 = vld [vmem:[%s1025 + $0x50] sm:$0xff]
    %v1037 = vld [vmem:[%s1025 + $0x58] sm:$0xff]
    %v1038 = vld [vmem:[%s1025 + $0x60] sm:$0xff]
    %v1039 = vld [vmem:[%s1025 + $0x68] sm:$0xff]
    %v1040 = vld [vmem:[%s1025 + $0x70] sm:$0xff]
    %v1041 = vld [vmem:[%s1025 + $0x78] sm:$0xff]
    %1042 = vmatpush.msra.mxu0 %v1041
    %1043 = vmatpush.msra.mxu0 %v1040
    %1044 = vmatpush.msra.mxu0 %v1039
    %1045 = vmatpush.msra.mxu0 %v1038
    %1046 = vmatpush.msra.mxu0 %v1037
    %1047 = vmatpush.msra.mxu0 %v1036
    %1048 = vmatpush.msra.mxu0 %v1035
    %1049 = vmatpush.msra.mxu0 %v1034
    %1050 = vmatpush.msra.mxu0 %v1033
    %1051 = vmatpush.msra.mxu0 %v1032
    %1052 = vmatpush.msra.mxu0 %v1031
    %1053 = vmatpush.msra.mxu0 %v1030
    %1054 = vmatpush.msra.mxu0 %v1029
    %1055 = vmatpush.msra.mxu0 %v1028
    %1056 = vmatpush.msra.mxu0 %v1027
    %1057 = vmatpush.msra.mxu0 %v1026
    %1058 = vmatmul.f32.gmra.mxu0 %v898
    %v1059 = vpop.f32.mrf.mxu0
    %v1060 = vadd.f32 0.0, %v1059
    %1061 = vmatmul.f32.gmra.mxu0 %v901
    %v1062 = vpop.f32.mrf.mxu0
    %v1063 = vadd.f32 0.0, %v1062
    %1064 = vdwg.mxu0
    %v1065 = vadd.f32 %v1023, %v1060
    %v1066 = vadd.f32 %v1024, %v1063
    %v1067 = vperm.slane %v64, 4
    %v1068 = vadd.f32 %v1065, %v1067
    %v1069 = vadd.f32 %v1066, %v1067
    %v1070 = vadd.f32 %v1068, %v1069
    %v1071 = vrot.slane %v1070, 4
    %v1072 = vadd.f32 %v1070, %v1071
    %v1073 = vrot.slane %v1072, 2
    %v1074 = vadd.f32 %v1072, %v1073
    %v1075 = vrot.slane %v1074, 1
    %v1076 = vadd.f32 %v1074, %v1075
    %v1077 = vmul.f32 %v1076, %v311
    %v1078 = vmul.f32 %v1077, %v64
    %v1079 = vperm.slane %v1078, 7
    %v1080 = vsub.f32 %v1068, %v1079
    %v1081 = vsub.f32 %v1069, %v1079
    %v1082 = vmul.f32 %v1080, %v1080
    %v1083 = vmul.f32 %v1081, %v1081
    %v1084 = vadd.f32 %v1082, %v1083
    %v1085 = vrot.slane %v1084, 4
    %v1086 = vadd.f32 %v1084, %v1085
    %v1087 = vrot.slane %v1086, 2
    %v1088 = vadd.f32 %v1086, %v1087
    %v1089 = vrot.slane %v1088, 1
    %v1090 = vadd.f32 %v1088, %v1089
    %v1091 = vmul.f32 %v1090, %v311
    %v1092 = vperm.slane %v64, 5
    %v1093 = vmul.f32 %v1092, %v1080
    %v1094 = vmul.f32 %v1092, %v1081
    %v1095 = vadd.f32 %v1091, 1e-05
    %v1096 = vrsqrt.pop %v1095
    %v1097 = vmul.f32 %v1096, %v1095
    %v1098 = vmul.f32 %v1097, %v1096
    %v1099 = vmul.f32 0.5, %v1098
    %v1100 = vsub.f32 1.5, %v1099
    %v1101 = vmul.f32 %v1096, %v1100
    %vm1102 = vweird.f32 %v1095
    %vm1103 = vweird.f32 %v1096
    %vm1104 = vmor %vm1102, %vm1103
    %v1105 = vsel %vm1104, %v1096, %v1101
    %v1106 = vmul.f32 %v1093, %v1105
    %v1107 = vmul.f32 %v1094, %v1105
    %v1108 = vperm.slane %v64, 6
    %v1109 = vadd.f32 %v1106, %v1108
    %v1110 = vadd.f32 %v1107, %v1108
    %v1111 = vadd.f32 %v61, %v1109
    %v1112 = vadd.f32 %v62, %v1110
    %v1113 = vmax.f32 %v1111, 0.0
    %v1114 = vmax.f32 %v1112, 0.0
    %v1115 = vadd.f32 %v1113, %v1114
    %v1116 = vrot.slane %v1115, 4
    %v1117 = vadd.f32 %v1115, %v1116
    %v1118 = vrot.slane %v1117, 2
    %v1119 = vadd.f32 %v1117, %v1118
    %v1120 = vrot.slane %v1119, 1
    %v1121 = vadd.f32 %v1119, %v1120
    %v1122 = vmul.f32 %v1121, %v311
    %v1123 = vmax.f32 %v1122, 0.0
    %v1124 = vld [vmem:[#allocation5] sm:$0xff]
    %v1125 = vld [vmem:[#allocation5 + $0x8] sm:$0xff]
    %v1126 = vld [vmem:[#allocation5 + $0x10] sm:$0xff]
    %v1127 = vld [vmem:[#allocation5 + $0x18] sm:$0xff]
    %v1128 = vld [vmem:[#allocation5 + $0x20] sm:$0xff]
    %v1129 = vld [vmem:[#allocation5 + $0x28] sm:$0xff]
    %v1130 = vld [vmem:[#allocation5 + $0x30] sm:$0xff]
    %v1131 = vld [vmem:[#allocation5 + $0x38] sm:$0xff]
    %v1132 = vld [vmem:[#allocation5 + $0x40] sm:$0xff]
    %v1133 = vld [vmem:[#allocation5 + $0x48] sm:$0xff]
    %v1134 = vld [vmem:[#allocation5 + $0x50] sm:$0xff]
    %v1135 = vld [vmem:[#allocation5 + $0x58] sm:$0xff]
    %v1136 = vld [vmem:[#allocation5 + $0x60] sm:$0xff]
    %v1137 = vld [vmem:[#allocation5 + $0x68] sm:$0xff]
    %v1138 = vld [vmem:[#allocation5 + $0x70] sm:$0xff]
    %v1139 = vld [vmem:[#allocation5 + $0x78] sm:$0xff]
    %1140 = vmatpush.msra.mxu0 %v1139
    %1141 = vmatpush.msra.mxu0 %v1138
    %1142 = vmatpush.msra.mxu0 %v1137
    %1143 = vmatpush.msra.mxu0 %v1136
    %1144 = vmatpush.msra.mxu0 %v1135
    %1145 = vmatpush.msra.mxu0 %v1134
    %1146 = vmatpush.msra.mxu0 %v1133
    %1147 = vmatpush.msra.mxu0 %v1132
    %1148 = vmatpush.msra.mxu0 %v1131
    %1149 = vmatpush.msra.mxu0 %v1130
    %1150 = vmatpush.msra.mxu0 %v1129
    %1151 = vmatpush.msra.mxu0 %v1128
    %1152 = vmatpush.msra.mxu0 %v1127
    %1153 = vmatpush.msra.mxu0 %v1126
    %1154 = vmatpush.msra.mxu0 %v1125
    %1155 = vmatpush.msra.mxu0 %v1124
    %1156 = vmatmul.f32.gmra.mxu0 %v1123
    %v1157 = vpop.f32.mrf.mxu0
    %v1158 = vadd.f32 %v65, %v1157
    %1159 = vdwg.mxu0
    %v1160 = vmax.f32 %v1158, 0.0
    %v1161 = vperm.slane %v1160, 0
    %1162 = vst [vmem:[#allocation7] sm:$0xff] %v1161
    // Predicated region
    $region30: #{tpu_custom_call.1} parent=1 // pred_check
      _
    $region31: #{tpu_custom_call.1} parent=1 // pred_check_branch
      %1164 = sbr.rel (0) target = $region33
    $region32: #{tpu_custom_call.1} parent=1 // pred_region
      %1166 = vsyncadd [#allocation4], 0
      %s1168 = sshll.u32 [#allocation7], 4
      %s1169 = int_to_ptr.vmem [resolvable:$true] %s1168
      %s1170 = sshll.u32 %s5, 4
      %s1171 = int_to_ptr.hbm [resolvable:$true] %s1170
      %1173 = dma.vmem_to_hbm [thread:$0]  %s1169, 128, %s1171, [#allocation4]
    $region33: #{tpu_custom_call.1} parent=1 // pred_fallthru
      _
    // Predicated region
    $region34: #{tpu_custom_call.1} parent=1 // pred_check
      _
    $region35: #{tpu_custom_call.1} parent=1 // pred_check_branch
      %1175 = sbr.rel (0) target = $region37
    $region36: #{tpu_custom_call.1} parent=1 // pred_region
      %1177 = dma.done [#allocation4], 128
    $region37: #{tpu_custom_call.1} parent=1 // pred_fallthru
      _
    %1178 = vsyncpa [#allocation3], 1
    %1179 = vsyncpa [#allocation6], 1
    %1180 = vsyncpa [#allocation4], 1

</llo_original>
